<compile_context>
chip_gen: v7x
topology: tpu7x:2x2x1
jax: 0.10.0
libtpu: 0.0.40
codegen_flags: <defaults>
</compile_context>

<pallas_src>
import jax
import jax.numpy as jnp
from jax.experimental import pallas as pl
from jax.experimental.pallas import tpu as pltpu


def _codebook_kernel(x_ref, e_ref, xq_ref, idx_ref):
    # x_ref  : (B, K, D)  float32
    # e_ref  : (K, N, D)  float32
    # xq_ref : (B, K*D)   float32  (lane-dense quantized output)
    # idx_ref: (B, K)     int32
    x = x_ref[...]                                   # (B, K, D)
    e = e_ref[...]                                   # (K, N, D)
    B, K, D = x_ref.shape
    N = e_ref.shape[1]

    e2 = jnp.sum(e * e, axis=-1)                     # (K, N) entry squared norms
    col = jax.lax.broadcasted_iota(jnp.int32, (B, N), 1)   # (B, N)

    q_parts = []
    idx_parts = []
    for k in range(K):                               # K is small & static: unrolled
        xk = x[:, k, :]                              # (B, D)
        ek = e[k]                                    # (N, D)
        # argmin_n ||x - e_n||^2 == argmin_n (||e_n||^2 - 2 x.e_n)
        xe = jnp.dot(xk, ek.T, preferred_element_type=jnp.float32)     # (B, N) MXU
        score = e2[k:k + 1, :] - 2.0 * xe                               # (B, N)
        smin = jnp.min(score, axis=-1, keepdims=True)                   # (B, 1)
        # First-index argmin (matches torch.argmin tie-breaking).
        idx_k = jnp.min(jnp.where(score <= smin, col, N),
                        axis=-1, keepdims=True)                         # (B, 1)
        onehot = (col == idx_k).astype(jnp.float32)                     # (B, N)
        q_k = jnp.dot(onehot, ek, preferred_element_type=jnp.float32)   # (B, D) MXU
        q_parts.append(q_k)
        idx_parts.append(idx_k)

    # Single lane-dense stores (one (8,128) f32 block, one (8,K) i32 block).
    xq_ref[...] = jnp.concatenate(q_parts, axis=-1)                     # (B, K*D)
    idx_ref[...] = jnp.concatenate(idx_parts, axis=-1).astype(jnp.int32)  # (B, K)


def codebook_forward(x, entries):
    """
    x:       (batch, num_codebooks, dim)        float32
    entries: (num_codebooks, num_entries, dim)  float32
    returns: x_q (batch, num_codebooks, dim) float32,
             idx (batch, num_codebooks)      int32
    """
    B, K, D = x.shape
    _, N, _ = entries.shape

    xq_flat, idx = pl.pallas_call(
        _codebook_kernel,
        out_shape=(
            jax.ShapeDtypeStruct((B, K * D), jnp.float32),
            jax.ShapeDtypeStruct((B, K), jnp.int32),
        ),
        in_specs=[
            pl.BlockSpec(memory_space=pltpu.MemorySpace.VMEM),
            pl.BlockSpec(memory_space=pltpu.MemorySpace.VMEM),
        ],
        out_specs=(
            pl.BlockSpec(memory_space=pltpu.MemorySpace.VMEM),
            pl.BlockSpec(memory_space=pltpu.MemorySpace.VMEM),
        ),
    )(x, entries)

    # Row-major (B, K*D) -> (B, K, D) split is a free metadata reshape.
    return xq_flat.reshape(B, K, D), idx


if __name__ == "__main__":
    # Small shapes consistent with the module: batch=8, num_codebooks=4,
    # num_entries=16, dim=32 (dim_entries defaults to dim).
    batch, num_codebooks, num_entries, dim = 8, 4, 16, 32

    key = jax.random.PRNGKey(0)
    kx, ke = jax.random.split(key)
    x = jax.random.normal(kx, (batch, num_codebooks, dim), dtype=jnp.float32)
    # Deterministic parameter init (torch.randn analogue).
    entries = jax.random.normal(
        ke, (num_codebooks, num_entries, dim), dtype=jnp.float32
    )

    x_q, idx = codebook_forward(x, entries)
    jax.block_until_ready((x_q, idx))

    # Pure-JAX reference (cdist + argmin + gather + straight-through).
    xt = jnp.transpose(x, (1, 0, 2))                                   # (K, B, D)
    dist = jnp.linalg.norm(xt[:, :, None, :] - entries[:, None, :, :], axis=-1)
    ref_idx = jnp.argmin(dist, axis=-1)                                # (K, B)
    ref_q = jnp.take_along_axis(entries, ref_idx[:, :, None], axis=1)  # (K, B, D)
    ref_xq = jnp.transpose(xt + (ref_q - xt), (1, 0, 2))               # (B, K, D)

    assert jnp.array_equal(idx, ref_idx.T), "index mismatch"
    assert jnp.allclose(x_q, ref_xq, atol=1e-5), "quantized output mismatch"
    print("KERNEL_OK")
</pallas_src>

<mosaic_0001>
module attributes {stable_mosaic.version = 11 : i64} {
  func.func @_codebook_kernel(%arg0: memref<8x4x32xf32, #tpu.memory_space<vmem>>, %arg1: memref<4x16x32xf32, #tpu.memory_space<vmem>>, %arg2: memref<8x128xf32, #tpu.memory_space<vmem>>, %arg3: memref<8x4xi32, #tpu.memory_space<vmem>>) attributes {dimension_semantics = [], scalar_prefetch = 0 : i64, scratch_operands = 0 : i64, tpu.core_type = #tpu.core_type<tc>} {
    %c0 = arith.constant 0 : index
    %c0_0 = arith.constant 0 : index
    %c0_1 = arith.constant 0 : index
    %0 = vector.load %arg0[%c0, %c0_0, %c0_1] : memref<8x4x32xf32, #tpu.memory_space<vmem>>, vector<8x4x32xf32>
    %c0_2 = arith.constant 0 : index
    %c0_3 = arith.constant 0 : index
    %c0_4 = arith.constant 0 : index
    %1 = vector.load %arg1[%c0_2, %c0_3, %c0_4] : memref<4x16x32xf32, #tpu.memory_space<vmem>>, vector<4x16x32xf32>
    %2 = arith.mulf %1, %1 : vector<4x16x32xf32>
    %cst = arith.constant dense<0.000000e+00> : vector<4x16xf32>
    %3 = vector.multi_reduction <add>, %2, %cst [2] : vector<4x16x32xf32> to vector<4x16xf32>
    %4 = tpu.iota {dimensions = array<i32: 1>} : vector<8x16xi32>
    %5 = vector.extract_strided_slice %0 {offsets = [0, 0, 0], sizes = [8, 1, 32], strides = [1, 1, 1]} : vector<8x4x32xf32> to vector<8x1x32xf32>
    %6 = vector.shape_cast %5 : vector<8x1x32xf32> to vector<8x32xf32>
    %7 = vector.extract_strided_slice %1 {offsets = [0, 0, 0], sizes = [1, 16, 32], strides = [1, 1, 1]} : vector<4x16x32xf32> to vector<1x16x32xf32>
    %8 = vector.shape_cast %7 : vector<1x16x32xf32> to vector<16x32xf32>
    %9 = tpu.transpose %8, [1, 0] : vector<16x32xf32> -> vector<32x16xf32>
    %cst_5 = arith.constant dense<0.000000e+00> : vector<8x16xf32>
    %10 = tpu.matmul %6, %9, %cst_5 {dimension_numbers = #tpu.dot_dimension_numbers<[1], [0], [0], [1], [0, 0, 1, 1], [], []>} : vector<8x32xf32>, vector<32x16xf32>, vector<8x16xf32> -> vector<8x16xf32>
    %11 = vector.extract_strided_slice %3 {offsets = [0, 0], sizes = [1, 16], strides = [1, 1]} : vector<4x16xf32> to vector<1x16xf32>
    %cst_6 = arith.constant 2.000000e+00 : f32
    %12 = vector.broadcast %cst_6 : f32 to vector<8x16xf32>
    %13 = arith.mulf %12, %10 : vector<8x16xf32>
    %14 = vector.broadcast %11 : vector<1x16xf32> to vector<8x16xf32>
    %15 = arith.subf %14, %13 : vector<8x16xf32>
    %cst_7 = arith.constant dense<0x7F800000> : vector<8xf32>
    %16 = vector.multi_reduction <minimumf>, %15, %cst_7 [1] : vector<8x16xf32> to vector<8xf32>
    %17 = vector.shape_cast %16 : vector<8xf32> to vector<8x1xf32>
    %18 = vector.broadcast %17 : vector<8x1xf32> to vector<8x16xf32>
    %19 = arith.cmpf ole, %15, %18 : vector<8x16xf32>
    %c16_i32 = arith.constant 16 : i32
    %20 = vector.broadcast %c16_i32 : i32 to vector<8x16xi32>
    %21 = arith.select %19, %4, %20 : vector<8x16xi1>, vector<8x16xi32>
    %cst_8 = arith.constant dense<2147483647> : vector<8xi32>
    %22 = vector.multi_reduction <minsi>, %21, %cst_8 [1] : vector<8x16xi32> to vector<8xi32>
    %23 = vector.shape_cast %22 : vector<8xi32> to vector<8x1xi32>
    %24 = vector.broadcast %23 : vector<8x1xi32> to vector<8x16xi32>
    %25 = arith.cmpi eq, %4, %24 : vector<8x16xi32>
    %26 = arith.extui %25 : vector<8x16xi1> to vector<8x16xi32>
    %27 = arith.sitofp %26 : vector<8x16xi32> to vector<8x16xf32>
    %cst_9 = arith.constant dense<0.000000e+00> : vector<8x32xf32>
    %28 = tpu.matmul %27, %8, %cst_9 {dimension_numbers = #tpu.dot_dimension_numbers<[1], [0], [0], [1], [0, 0, 1, 1], [], []>} : vector<8x16xf32>, vector<16x32xf32>, vector<8x32xf32> -> vector<8x32xf32>
    %29 = vector.extract_strided_slice %0 {offsets = [0, 1, 0], sizes = [8, 1, 32], strides = [1, 1, 1]} : vector<8x4x32xf32> to vector<8x1x32xf32>
    %30 = vector.shape_cast %29 : vector<8x1x32xf32> to vector<8x32xf32>
    %31 = vector.extract_strided_slice %1 {offsets = [1, 0, 0], sizes = [1, 16, 32], strides = [1, 1, 1]} : vector<4x16x32xf32> to vector<1x16x32xf32>
    %32 = vector.shape_cast %31 : vector<1x16x32xf32> to vector<16x32xf32>
    %33 = tpu.transpose %32, [1, 0] : vector<16x32xf32> -> vector<32x16xf32>
    %cst_10 = arith.constant dense<0.000000e+00> : vector<8x16xf32>
    %34 = tpu.matmul %30, %33, %cst_10 {dimension_numbers = #tpu.dot_dimension_numbers<[1], [0], [0], [1], [0, 0, 1, 1], [], []>} : vector<8x32xf32>, vector<32x16xf32>, vector<8x16xf32> -> vector<8x16xf32>
    %35 = vector.extract_strided_slice %3 {offsets = [1, 0], sizes = [1, 16], strides = [1, 1]} : vector<4x16xf32> to vector<1x16xf32>
    %cst_11 = arith.constant 2.000000e+00 : f32
    %36 = vector.broadcast %cst_11 : f32 to vector<8x16xf32>
    %37 = arith.mulf %36, %34 : vector<8x16xf32>
    %38 = vector.broadcast %35 : vector<1x16xf32> to vector<8x16xf32>
    %39 = arith.subf %38, %37 : vector<8x16xf32>
    %cst_12 = arith.constant dense<0x7F800000> : vector<8xf32>
    %40 = vector.multi_reduction <minimumf>, %39, %cst_12 [1] : vector<8x16xf32> to vector<8xf32>
    %41 = vector.shape_cast %40 : vector<8xf32> to vector<8x1xf32>
    %42 = vector.broadcast %41 : vector<8x1xf32> to vector<8x16xf32>
    %43 = arith.cmpf ole, %39, %42 : vector<8x16xf32>
    %c16_i32_13 = arith.constant 16 : i32
    %44 = vector.broadcast %c16_i32_13 : i32 to vector<8x16xi32>
    %45 = arith.select %43, %4, %44 : vector<8x16xi1>, vector<8x16xi32>
    %cst_14 = arith.constant dense<2147483647> : vector<8xi32>
    %46 = vector.multi_reduction <minsi>, %45, %cst_14 [1] : vector<8x16xi32> to vector<8xi32>
    %47 = vector.shape_cast %46 : vector<8xi32> to vector<8x1xi32>
    %48 = vector.broadcast %47 : vector<8x1xi32> to vector<8x16xi32>
    %49 = arith.cmpi eq, %4, %48 : vector<8x16xi32>
    %50 = arith.extui %49 : vector<8x16xi1> to vector<8x16xi32>
    %51 = arith.sitofp %50 : vector<8x16xi32> to vector<8x16xf32>
    %cst_15 = arith.constant dense<0.000000e+00> : vector<8x32xf32>
    %52 = tpu.matmul %51, %32, %cst_15 {dimension_numbers = #tpu.dot_dimension_numbers<[1], [0], [0], [1], [0, 0, 1, 1], [], []>} : vector<8x16xf32>, vector<16x32xf32>, vector<8x32xf32> -> vector<8x32xf32>
    %53 = vector.extract_strided_slice %0 {offsets = [0, 2, 0], sizes = [8, 1, 32], strides = [1, 1, 1]} : vector<8x4x32xf32> to vector<8x1x32xf32>
    %54 = vector.shape_cast %53 : vector<8x1x32xf32> to vector<8x32xf32>
    %55 = vector.extract_strided_slice %1 {offsets = [2, 0, 0], sizes = [1, 16, 32], strides = [1, 1, 1]} : vector<4x16x32xf32> to vector<1x16x32xf32>
    %56 = vector.shape_cast %55 : vector<1x16x32xf32> to vector<16x32xf32>
    %57 = tpu.transpose %56, [1, 0] : vector<16x32xf32> -> vector<32x16xf32>
    %cst_16 = arith.constant dense<0.000000e+00> : vector<8x16xf32>
    %58 = tpu.matmul %54, %57, %cst_16 {dimension_numbers = #tpu.dot_dimension_numbers<[1], [0], [0], [1], [0, 0, 1, 1], [], []>} : vector<8x32xf32>, vector<32x16xf32>, vector<8x16xf32> -> vector<8x16xf32>
    %59 = vector.extract_strided_slice %3 {offsets = [2, 0], sizes = [1, 16], strides = [1, 1]} : vector<4x16xf32> to vector<1x16xf32>
    %cst_17 = arith.constant 2.000000e+00 : f32
    %60 = vector.broadcast %cst_17 : f32 to vector<8x16xf32>
    %61 = arith.mulf %60, %58 : vector<8x16xf32>
    %62 = vector.broadcast %59 : vector<1x16xf32> to vector<8x16xf32>
    %63 = arith.subf %62, %61 : vector<8x16xf32>
    %cst_18 = arith.constant dense<0x7F800000> : vector<8xf32>
    %64 = vector.multi_reduction <minimumf>, %63, %cst_18 [1] : vector<8x16xf32> to vector<8xf32>
    %65 = vector.shape_cast %64 : vector<8xf32> to vector<8x1xf32>
    %66 = vector.broadcast %65 : vector<8x1xf32> to vector<8x16xf32>
    %67 = arith.cmpf ole, %63, %66 : vector<8x16xf32>
    %c16_i32_19 = arith.constant 16 : i32
    %68 = vector.broadcast %c16_i32_19 : i32 to vector<8x16xi32>
    %69 = arith.select %67, %4, %68 : vector<8x16xi1>, vector<8x16xi32>
    %cst_20 = arith.constant dense<2147483647> : vector<8xi32>
    %70 = vector.multi_reduction <minsi>, %69, %cst_20 [1] : vector<8x16xi32> to vector<8xi32>
    %71 = vector.shape_cast %70 : vector<8xi32> to vector<8x1xi32>
    %72 = vector.broadcast %71 : vector<8x1xi32> to vector<8x16xi32>
    %73 = arith.cmpi eq, %4, %72 : vector<8x16xi32>
    %74 = arith.extui %73 : vector<8x16xi1> to vector<8x16xi32>
    %75 = arith.sitofp %74 : vector<8x16xi32> to vector<8x16xf32>
    %cst_21 = arith.constant dense<0.000000e+00> : vector<8x32xf32>
    %76 = tpu.matmul %75, %56, %cst_21 {dimension_numbers = #tpu.dot_dimension_numbers<[1], [0], [0], [1], [0, 0, 1, 1], [], []>} : vector<8x16xf32>, vector<16x32xf32>, vector<8x32xf32> -> vector<8x32xf32>
    %77 = vector.extract_strided_slice %0 {offsets = [0, 3, 0], sizes = [8, 1, 32], strides = [1, 1, 1]} : vector<8x4x32xf32> to vector<8x1x32xf32>
    %78 = vector.shape_cast %77 : vector<8x1x32xf32> to vector<8x32xf32>
    %79 = vector.extract_strided_slice %1 {offsets = [3, 0, 0], sizes = [1, 16, 32], strides = [1, 1, 1]} : vector<4x16x32xf32> to vector<1x16x32xf32>
    %80 = vector.shape_cast %79 : vector<1x16x32xf32> to vector<16x32xf32>
    %81 = tpu.transpose %80, [1, 0] : vector<16x32xf32> -> vector<32x16xf32>
    %cst_22 = arith.constant dense<0.000000e+00> : vector<8x16xf32>
    %82 = tpu.matmul %78, %81, %cst_22 {dimension_numbers = #tpu.dot_dimension_numbers<[1], [0], [0], [1], [0, 0, 1, 1], [], []>} : vector<8x32xf32>, vector<32x16xf32>, vector<8x16xf32> -> vector<8x16xf32>
    %83 = vector.extract_strided_slice %3 {offsets = [3, 0], sizes = [1, 16], strides = [1, 1]} : vector<4x16xf32> to vector<1x16xf32>
    %cst_23 = arith.constant 2.000000e+00 : f32
    %84 = vector.broadcast %cst_23 : f32 to vector<8x16xf32>
    %85 = arith.mulf %84, %82 : vector<8x16xf32>
    %86 = vector.broadcast %83 : vector<1x16xf32> to vector<8x16xf32>
    %87 = arith.subf %86, %85 : vector<8x16xf32>
    %cst_24 = arith.constant dense<0x7F800000> : vector<8xf32>
    %88 = vector.multi_reduction <minimumf>, %87, %cst_24 [1] : vector<8x16xf32> to vector<8xf32>
    %89 = vector.shape_cast %88 : vector<8xf32> to vector<8x1xf32>
    %90 = vector.broadcast %89 : vector<8x1xf32> to vector<8x16xf32>
    %91 = arith.cmpf ole, %87, %90 : vector<8x16xf32>
    %c16_i32_25 = arith.constant 16 : i32
    %92 = vector.broadcast %c16_i32_25 : i32 to vector<8x16xi32>
    %93 = arith.select %91, %4, %92 : vector<8x16xi1>, vector<8x16xi32>
    %cst_26 = arith.constant dense<2147483647> : vector<8xi32>
    %94 = vector.multi_reduction <minsi>, %93, %cst_26 [1] : vector<8x16xi32> to vector<8xi32>
    %95 = vector.shape_cast %94 : vector<8xi32> to vector<8x1xi32>
    %96 = vector.broadcast %95 : vector<8x1xi32> to vector<8x16xi32>
    %97 = arith.cmpi eq, %4, %96 : vector<8x16xi32>
    %98 = arith.extui %97 : vector<8x16xi1> to vector<8x16xi32>
    %99 = arith.sitofp %98 : vector<8x16xi32> to vector<8x16xf32>
    %cst_27 = arith.constant dense<0.000000e+00> : vector<8x32xf32>
    %100 = tpu.matmul %99, %80, %cst_27 {dimension_numbers = #tpu.dot_dimension_numbers<[1], [0], [0], [1], [0, 0, 1, 1], [], []>} : vector<8x16xf32>, vector<16x32xf32>, vector<8x32xf32> -> vector<8x32xf32>
    %101 = tpu.concatenate %28, %52, %76, %100 in 1 : vector<8x32xf32>, vector<8x32xf32>, vector<8x32xf32>, vector<8x32xf32> -> vector<8x128xf32>
    %c0_28 = arith.constant 0 : index
    %c0_29 = arith.constant 0 : index
    %102 = vector.load %arg2[%c0_28, %c0_29] : memref<8x128xf32, #tpu.memory_space<vmem>>, vector<8x128xf32>
    tpu.vector_store %arg2[%c0_28, %c0_29], %101 {strides = array<i32>} : memref<8x128xf32, #tpu.memory_space<vmem>>, vector<8x128xf32>,
    %103 = tpu.concatenate %23, %47, %71, %95 in 1 : vector<8x1xi32>, vector<8x1xi32>, vector<8x1xi32>, vector<8x1xi32> -> vector<8x4xi32>
    %c0_30 = arith.constant 0 : index
    %c0_31 = arith.constant 0 : index
    %104 = vector.load %arg3[%c0_30, %c0_31] : memref<8x4xi32, #tpu.memory_space<vmem>>, vector<8x4xi32>
    tpu.vector_store %arg3[%c0_30, %c0_31], %103 {strides = array<i32>} : memref<8x4xi32, #tpu.memory_space<vmem>>, vector<8x4xi32>,
    return
  }
}

</mosaic_0001>

<llo_original>
// kernel: tpu_custom_call.1
$region0: #{tpu_custom_call.1}
  #allocation0 [shape = 'u32[]', space=smem, size = 0x4, offset = 0x4, fixed_abs, tag = 'smem constant byte address 0x4 - core index']
  #allocation1 [shape = 'u32[144,128]{1,0:T(1,128)}', space=vmem, size = 0x12000, scoped, tag = 'internal scratch']
  %s0 = inlined_call_operand.hbm [shape: f32[8,4,32], index: 0, kind: input, shape index: {}]
  %s1 = inlined_call_operand.hbm [shape: f32[4,16,32], index: 1, kind: input, shape index: {}]
  %s2 = inlined_call_operand.hbm [shape: f32[8,128], index: 2, kind: output, shape index: {0}]
  %s3 = inlined_call_operand.vmem [shape: s32[8,4], index: 3, kind: output, shape index: {1}]
  %4 = xla_tuple %s2, %s3
  %s5 = sld [smem:[#allocation0]]
  $region34: #{tpu_custom_call.1} parent=0
    _
  %s7 = ssub.s32 1, %s5
  %s8 = scalar_select 0, %s7, %s5
  $region1: #{tpu_custom_call.1} parent=0
    #allocation2 [shape = 'u8[16384]{0}', space=vmem, size = 0x4000, scoped, tag = 'input window, operand 0, single buffered']
    #allocation3 [shape = 's32[1]{0}', space=sflag, size = 0x4, scoped, tag = 'scoped memory for tpu_custom_call.1']
    #allocation4 [shape = 's32[1]{0}', space=sflag, size = 0x4, scoped, tag = 'scoped memory for tpu_custom_call.1']
    #allocation5 [shape = 'u8[32768]{0}', space=vmem, size = 0x8000, scoped, tag = 'input window, operand 1, single buffered']
    #allocation6 [shape = 's32[1]{0}', space=sflag, size = 0x4, scoped, tag = 'scoped memory for tpu_custom_call.1']
    #allocation7 [shape = 'u8[4096]{0}', space=vmem, size = 0x1000, scoped, tag = 'output window, operand 0, single buffered']
    %9 = vsyncpa [#allocation3], 0
    %10 = vsyncpa [#allocation6], 0
    %11 = vsyncpa [#allocation4], 0
    // Predicated region
    $region2: #{tpu_custom_call.1} parent=1 // pred_check
      _
    $region3: #{tpu_custom_call.1} parent=1 // pred_check_branch
      %13 = sbr.rel (0) target = $region5
    $region4: #{tpu_custom_call.1} parent=1 // pred_region
      %s15 = ssub.s32 512, 512
      %16 = vsyncadd [#allocation3], %s15
      %s17 = sshll.u32 [#allocation2], 4
      %s18 = int_to_ptr.vmem [resolvable:$true] %s17
      %23 = dma.hbm_to_vmem [thread:$0]  %s0, 512, %s18, [#allocation3], 64, 64, 4
    $region5: #{tpu_custom_call.1} parent=1 // pred_fallthru
      _
    // Predicated region
    $region6: #{tpu_custom_call.1} parent=1 // pred_check
      _
    $region7: #{tpu_custom_call.1} parent=1 // pred_check_branch
      %25 = sbr.rel (0) target = $region9
    $region8: #{tpu_custom_call.1} parent=1 // pred_region
      %s27 = ssub.s32 1024, 1024
      %28 = vsyncadd [#allocation6], %s27
      %s29 = sshll.u32 [#allocation5], 4
      %s30 = int_to_ptr.vmem [resolvable:$true] %s29
      %35 = dma.hbm_to_vmem [thread:$0]  %s1, 1024, %s30, [#allocation6], 128, 128, 8
    $region9: #{tpu_custom_call.1} parent=1 // pred_fallthru
      _
    // Predicated region
    $region10: #{tpu_custom_call.1} parent=1 // pred_check
      _
    $region11: #{tpu_custom_call.1} parent=1 // pred_check_branch
      %37 = sbr.rel (0) target = $region13
    $region12: #{tpu_custom_call.1} parent=1 // pred_region
      %38 = dma.done [#allocation3], 512
    $region13: #{tpu_custom_call.1} parent=1 // pred_fallthru
      _
    // Predicated region
    $region14: #{tpu_custom_call.1} parent=1 // pred_check
      _
    $region15: #{tpu_custom_call.1} parent=1 // pred_check_branch
      %40 = sbr.rel (0) target = $region17
    $region16: #{tpu_custom_call.1} parent=1 // pred_region
      %41 = dma.done [#allocation6], 1024
    $region17: #{tpu_custom_call.1} parent=1 // pred_fallthru
      _
    %v42 = vld [vmem:[#allocation2] sm:$0xf]
    %v43 = vld [vmem:[#allocation2 + $0x4] sm:$0xf]
    %v44 = vld [vmem:[#allocation2 + $0x8] sm:$0xf]
    %v45 = vld [vmem:[#allocation2 + $0xc] sm:$0xf]
    %v46 = vld [vmem:[#allocation2 + $0x10] sm:$0xf]
    %v47 = vld [vmem:[#allocation2 + $0x14] sm:$0xf]
    %v48 = vld [vmem:[#allocation2 + $0x18] sm:$0xf]
    %v49 = vld [vmem:[#allocation2 + $0x1c] sm:$0xf]
    %v50 = vld [vmem:[#allocation5] sm:$0xff]
    %v51 = vld [vmem:[#allocation5 + $0x8] sm:$0xff]
    %v52 = vld [vmem:[#allocation5 + $0x10] sm:$0xff]
    %v53 = vld [vmem:[#allocation5 + $0x18] sm:$0xff]
    %v54 = vld [vmem:[#allocation5 + $0x20] sm:$0xff]
    %v55 = vld [vmem:[#allocation5 + $0x28] sm:$0xff]
    %v56 = vld [vmem:[#allocation5 + $0x30] sm:$0xff]
    %v57 = vld [vmem:[#allocation5 + $0x38] sm:$0xff]
    %v58 = vmul.f32 %v50, %v50
    %v59 = vmul.f32 %v51, %v51
    %v60 = vmul.f32 %v52, %v52
    %v61 = vmul.f32 %v53, %v53
    %v62 = vmul.f32 %v54, %v54
    %v63 = vmul.f32 %v55, %v55
    %v64 = vmul.f32 %v56, %v56
    %v65 = vmul.f32 %v57, %v57
    %vm66 = vcmask 261120
    %v67 = vsel %vm66, %v58, 0.0
    %68 = vadd.xlane.f32.xlu0 %v67
    %v69 = vpop.xlane.xlu0 %68
    %v70 = vsel %vm66, %v59, 0.0
    %71 = vadd.xlane.f32.xlu0 %v70
    %v72 = vpop.xlane.xlu0 %71
    %v73 = vsel %vm66, %v60, 0.0
    %74 = vadd.xlane.f32.xlu0 %v73
    %v75 = vpop.xlane.xlu0 %74
    %v76 = vsel %vm66, %v61, 0.0
    %77 = vadd.xlane.f32.xlu0 %v76
    %v78 = vpop.xlane.xlu0 %77
    %v79 = vsel %vm66, %v62, 0.0
    %80 = vadd.xlane.f32.xlu0 %v79
    %v81 = vpop.xlane.xlu0 %80
    %v82 = vsel %vm66, %v63, 0.0
    %83 = vadd.xlane.f32.xlu0 %v82
    %v84 = vpop.xlane.xlu0 %83
    %v85 = vsel %vm66, %v64, 0.0
    %86 = vadd.xlane.f32.xlu0 %v85
    %v87 = vpop.xlane.xlu0 %86
    %v88 = vsel %vm66, %v65, 0.0
    %89 = vadd.xlane.f32.xlu0 %v88
    %v90 = vpop.xlane.xlu0 %89
    %v91 = vlaneseq
    %v92 = vand.u32 %v91, 127
    %v101 = vrot.slane %v43, 7
    %vm102 = vcmask 1041409
    %v103 = vsel %vm102, %v101, %v42
    %v104 = vrot.slane %v44, 6
    %vm105 = vcmask 1042434
    %v106 = vsel %vm105, %v104, %v103
    %v107 = vrot.slane %v45, 5
    %vm108 = vcmask 1043459
    %v109 = vsel %vm108, %v107, %v106
    %v110 = vrot.slane %v46, 4
    %vm111 = vcmask 1044484
    %v112 = vsel %vm111, %v110, %v109
    %v113 = vrot.slane %v47, 3
    %vm114 = vcmask 1045509
    %v115 = vsel %vm114, %v113, %v112
    %v116 = vrot.slane %v48, 2
    %vm117 = vcmask 1046534
    %v118 = vsel %vm117, %v116, %v115
    %v119 = vrot.slane %v49, 1
    %vm120 = vcmask 1047559
    %v121 = vsel %vm120, %v119, %v118
    %v122 = vsel %vm66, %v121, 0
    %v125 = vsel %vm66, %v50, 0
    %v128 = vsel %vm66, %v51, 0
    %130 = vmatprep.subr.mxu0 0.0
    %131 = vmatpush1.xpose.msra.mxu0 %v125
    %132 = vmatprep.subr.mxu0 0.0
    %133 = vmatpush1.xpose.msra.mxu0 %v128
    %134 = vmatprep.subr.mxu0 0.0
    %135 = vmatpush1.xpose.msra.mxu0 0.0
    %136 = vmatprep.subr.mxu0 0.0
    %137 = vmatpush1.xpose.msra.mxu0 0.0
    %138 = vmatprep.subr.mxu0 0.0
    %139 = vmatpush1.xpose.msra.mxu0 0.0
    %140 = vmatprep.subr.mxu0 0.0
    %141 = vmatpush1.xpose.msra.mxu0 0.0
    %142 = vmatprep.subr.mxu0 0.0
    %143 = vmatpush1.xpose.msra.mxu0 0.0
    %144 = vmatprep.subr.mxu0 0.0
    %145 = vmatpush1.xpose.msra.mxu0 0.0
    %146 = vmatprep.subr.mxu0 0.0
    %147 = vmatpush1.xpose.msra.mxu0 0.0
    %148 = vmatprep.subr.mxu0 0.0
    %149 = vmatpush1.xpose.msra.mxu0 0.0
    %150 = vmatprep.subr.mxu0 0.0
    %151 = vmatpush1.xpose.msra.mxu0 0.0
    %152 = vmatprep.subr.mxu0 0.0
    %153 = vmatpush1.xpose.msra.mxu0 0.0
    %154 = vmatprep.subr.mxu0 0.0
    %155 = vmatpush1.xpose.msra.mxu0 0.0
    %156 = vmatprep.subr.mxu0 0.0
    %157 = vmatpush1.xpose.msra.mxu0 0.0
    %158 = vmatprep.subr.mxu0 0.0
    %159 = vmatpush1.xpose.msra.mxu0 0.0
    %160 = vmatprep.subr.mxu0 0.0
    %161 = vmatpush1.xpose.msra.mxu0 0.0
    %162 = vmatprep.subr.mxu0 0.0
    %163 = vmatpush1.xpose.msra.mxu0 0.0
    %164 = vmatprep.subr.mxu0 0.0
    %165 = vmatpush1.xpose.msra.mxu0 0.0
    %166 = vmatprep.subr.mxu0 0.0
    %167 = vmatpush1.xpose.msra.mxu0 0.0
    %168 = vmatprep.subr.mxu0 0.0
    %169 = vmatpush1.xpose.msra.mxu0 0.0
    %170 = vmatprep.subr.mxu0 0.0
    %171 = vmatpush1.xpose.msra.mxu0 0.0
    %172 = vmatprep.subr.mxu0 0.0
    %173 = vmatpush1.xpose.msra.mxu0 0.0
    %174 = vmatprep.subr.mxu0 0.0
    %175 = vmatpush1.xpose.msra.mxu0 0.0
    %176 = vmatprep.subr.mxu0 0.0
    %177 = vmatpush1.xpose.msra.mxu0 0.0
    %178 = vmatprep.subr.mxu0 0.0
    %179 = vmatpush1.xpose.msra.mxu0 0.0
    %180 = vmatprep.subr.mxu0 0.0
    %181 = vmatpush1.xpose.msra.mxu0 0.0
    %182 = vmatprep.subr.mxu0 0.0
    %183 = vmatpush1.xpose.msra.mxu0 0.0
    %184 = vmatprep.subr.mxu0 0.0
    %185 = vmatpush1.xpose.msra.mxu0 0.0
    %186 = vmatprep.subr.mxu0 0.0
    %187 = vmatpush1.xpose.msra.mxu0 0.0
    %188 = vmatprep.subr.mxu0 0.0
    %189 = vmatpush1.xpose.msra.mxu0 0.0
    %190 = vmatprep.subr.mxu0 0.0
    %191 = vmatpush1.xpose.msra.mxu0 0.0
    %192 = vmatprep.subr.mxu0 0.0
    %193 = vmatpush1.xpose.msra.mxu0 0.0
    %194 = vmatprep.mubr.f32.mxu0 0.0
    %195 = vmatmul.mubr.f32.gmra.mrb[0].mxu0 %v122
    %v196 = vpop.f32.mrb[0].mxu0
    %v197 = vadd.f32 0.0, %v196
    %v198 = vpop.f32.mrb[0].mxu0
    %199 = vdwg.mxu0
    %v200 = vmul.f32 %v197, 2.0
    %v202 = vlaneseq
    %v203 = vshrl.u32 %v202, 7
    %v204 = vsub.s32 0, %v203
    %v205 = vrot.slane %v200, %v204
    %207 = vbcast.lane.b32.xlu0 %v205, 256
    %v208 = vpop.permute.xlu0 %207
    %s210 = sor.u32 256, 8
    %211 = vbcast.lane.b32.xlu0 %v205, %s210
    %v212 = vpop.permute.xlu0 %211
    %v213 = vlaneseq
    %v214 = vshrl.u32 %v213, 7
    %v215 = vsub.s32 1, %v214
    %v216 = vrot.slane %v200, %v215
    %218 = vbcast.lane.b32.xlu0 %v216, 256
    %v219 = vpop.permute.xlu0 %218
    %s221 = sor.u32 256, 8
    %222 = vbcast.lane.b32.xlu0 %v216, %s221
    %v223 = vpop.permute.xlu0 %222
    %v224 = vlaneseq
    %v225 = vshrl.u32 %v224, 7
    %v226 = vsub.s32 2, %v225
    %v227 = vrot.slane %v200, %v226
    %229 = vbcast.lane.b32.xlu0 %v227, 256
    %v230 = vpop.permute.xlu0 %229
    %s232 = sor.u32 256, 8
    %233 = vbcast.lane.b32.xlu0 %v227, %s232
    %v234 = vpop.permute.xlu0 %233
    %v235 = vlaneseq
    %v236 = vshrl.u32 %v235, 7
    %v237 = vsub.s32 3, %v236
    %v238 = vrot.slane %v200, %v237
    %240 = vbcast.lane.b32.xlu0 %v238, 256
    %v241 = vpop.permute.xlu0 %240
    %s243 = sor.u32 256, 8
    %244 = vbcast.lane.b32.xlu0 %v238, %s243
    %v245 = vpop.permute.xlu0 %244
    %v246 = vlaneseq
    %v247 = vshrl.u32 %v246, 7
    %v248 = vsub.s32 4, %v247
    %v249 = vrot.slane %v200, %v248
    %251 = vbcast.lane.b32.xlu0 %v249, 256
    %v252 = vpop.permute.xlu0 %251
    %s254 = sor.u32 256, 8
    %255 = vbcast.lane.b32.xlu0 %v249, %s254
    %v256 = vpop.permute.xlu0 %255
    %v257 = vlaneseq
    %v258 = vshrl.u32 %v257, 7
    %v259 = vsub.s32 5, %v258
    %v260 = vrot.slane %v200, %v259
    %262 = vbcast.lane.b32.xlu0 %v260, 256
    %v263 = vpop.permute.xlu0 %262
    %s265 = sor.u32 256, 8
    %266 = vbcast.lane.b32.xlu0 %v260, %s265
    %v267 = vpop.permute.xlu0 %266
    %v268 = vlaneseq
    %v269 = vshrl.u32 %v268, 7
    %v270 = vsub.s32 6, %v269
    %v271 = vrot.slane %v200, %v270
    %273 = vbcast.lane.b32.xlu0 %v271, 256
    %v274 = vpop.permute.xlu0 %273
    %s276 = sor.u32 256, 8
    %277 = vbcast.lane.b32.xlu0 %v271, %s276
    %v278 = vpop.permute.xlu0 %277
    %v279 = vlaneseq
    %v280 = vshrl.u32 %v279, 7
    %v281 = vsub.s32 7, %v280
    %v282 = vrot.slane %v200, %v281
    %284 = vbcast.lane.b32.xlu0 %v282, 256
    %v285 = vpop.permute.xlu0 %284
    %s287 = sor.u32 256, 8
    %288 = vbcast.lane.b32.xlu0 %v282, %s287
    %v289 = vpop.permute.xlu0 %288
    %v306 = vsub.f32 %v69, %v208
    %v307 = vsub.f32 %v72, %v212
    %v308 = vsub.f32 %v69, %v219
    %v309 = vsub.f32 %v72, %v223
    %v310 = vsub.f32 %v69, %v230
    %v311 = vsub.f32 %v72, %v234
    %v312 = vsub.f32 %v69, %v241
    %v313 = vsub.f32 %v72, %v245
    %v314 = vsub.f32 %v69, %v252
    %v315 = vsub.f32 %v72, %v256
    %v316 = vsub.f32 %v69, %v263
    %v317 = vsub.f32 %v72, %v267
    %v318 = vsub.f32 %v69, %v274
    %v319 = vsub.f32 %v72, %v278
    %v320 = vsub.f32 %v69, %v285
    %v321 = vsub.f32 %v72, %v289
    %338 = vset.pattern.permute.xlu0 0
    %339 = vperm.xlu0 %338, %v306
    %v340 = vpop.permute.xlu0 %339
    %341 = vset.pattern.permute.xlu0 0
    %342 = vperm.xlu0 %341, %v307
    %v343 = vpop.permute.xlu0 %342
    %344 = vset.pattern.permute.xlu0 0
    %345 = vperm.xlu0 %344, %v308
    %v346 = vpop.permute.xlu0 %345
    %347 = vset.pattern.permute.xlu0 0
    %348 = vperm.xlu0 %347, %v309
    %v349 = vpop.permute.xlu0 %348
    %350 = vset.pattern.permute.xlu0 0
    %351 = vperm.xlu0 %350, %v310
    %v352 = vpop.permute.xlu0 %351
    %353 = vset.pattern.permute.xlu0 0
    %354 = vperm.xlu0 %353, %v311
    %v355 = vpop.permute.xlu0 %354
    %356 = vset.pattern.permute.xlu0 0
    %357 = vperm.xlu0 %356, %v312
    %v358 = vpop.permute.xlu0 %357
    %359 = vset.pattern.permute.xlu0 0
    %360 = vperm.xlu0 %359, %v313
    %v361 = vpop.permute.xlu0 %360
    %362 = vset.pattern.permute.xlu0 0
    %363 = vperm.xlu0 %362, %v314
    %v364 = vpop.permute.xlu0 %363
    %365 = vset.pattern.permute.xlu0 0
    %366 = vperm.xlu0 %365, %v315
    %v367 = vpop.permute.xlu0 %366
    %368 = vset.pattern.permute.xlu0 0
    %369 = vperm.xlu0 %368, %v316
    %v370 = vpop.permute.xlu0 %369
    %371 = vset.pattern.permute.xlu0 0
    %372 = vperm.xlu0 %371, %v317
    %v373 = vpop.permute.xlu0 %372
    %374 = vset.pattern.permute.xlu0 0
    %375 = vperm.xlu0 %374, %v318
    %v376 = vpop.permute.xlu0 %375
    %377 = vset.pattern.permute.xlu0 0
    %378 = vperm.xlu0 %377, %v319
    %v379 = vpop.permute.xlu0 %378
    %380 = vset.pattern.permute.xlu0 0
    %381 = vperm.xlu0 %380, %v320
    %v382 = vpop.permute.xlu0 %381
    %383 = vset.pattern.permute.xlu0 0
    %384 = vperm.xlu0 %383, %v321
    %v385 = vpop.permute.xlu0 %384
    %v386 = vlaneseq
    %v387 = vshrl.u32 %v386, 7
    %v388 = vsub.s32 %v92, %v387
    %v389 = vrot.slane %v340, %v388
    %v390 = vadd.s32 %v92, 4294967288
    %v391 = vlaneseq
    %v392 = vshrl.u32 %v391, 7
    %v393 = vsub.s32 %v390, %v392
    %v394 = vrot.slane %v343, %v393
    %vm395 = vcmask 130112
    %v396 = vsel %vm395, %v394, %v389
    %v397 = vlaneseq
    %v398 = vshrl.u32 %v397, 7
    %v399 = vsub.s32 %v92, %v398
    %v400 = vrot.slane %v346, %v399
    %v401 = vlaneseq
    %v402 = vshrl.u32 %v401, 7
    %v403 = vsub.s32 %v390, %v402
    %v404 = vrot.slane %v349, %v403
    %v405 = vsel %vm395, %v404, %v400
    %v406 = vlaneseq
    %v407 = vshrl.u32 %v406, 7
    %v408 = vsub.s32 %v92, %v407
    %v409 = vrot.slane %v352, %v408
    %v410 = vlaneseq
    %v411 = vshrl.u32 %v410, 7
    %v412 = vsub.s32 %v390, %v411
    %v413 = vrot.slane %v355, %v412
    %v414 = vsel %vm395, %v413, %v409
    %v415 = vlaneseq
    %v416 = vshrl.u32 %v415, 7
    %v417 = vsub.s32 %v92, %v416
    %v418 = vrot.slane %v358, %v417
    %v419 = vlaneseq
    %v420 = vshrl.u32 %v419, 7
    %v421 = vsub.s32 %v390, %v420
    %v422 = vrot.slane %v361, %v421
    %v423 = vsel %vm395, %v422, %v418
    %v424 = vlaneseq
    %v425 = vshrl.u32 %v424, 7
    %v426 = vsub.s32 %v92, %v425
    %v427 = vrot.slane %v364, %v426
    %v428 = vlaneseq
    %v429 = vshrl.u32 %v428, 7
    %v430 = vsub.s32 %v390, %v429
    %v431 = vrot.slane %v367, %v430
    %v432 = vsel %vm395, %v431, %v427
    %v433 = vlaneseq
    %v434 = vshrl.u32 %v433, 7
    %v435 = vsub.s32 %v92, %v434
    %v436 = vrot.slane %v370, %v435
    %v437 = vlaneseq
    %v438 = vshrl.u32 %v437, 7
    %v439 = vsub.s32 %v390, %v438
    %v440 = vrot.slane %v373, %v439
    %v441 = vsel %vm395, %v440, %v436
    %v442 = vlaneseq
    %v443 = vshrl.u32 %v442, 7
    %v444 = vsub.s32 %v92, %v443
    %v445 = vrot.slane %v376, %v444
    %v446 = vlaneseq
    %v447 = vshrl.u32 %v446, 7
    %v448 = vsub.s32 %v390, %v447
    %v449 = vrot.slane %v379, %v448
    %v450 = vsel %vm395, %v449, %v445
    %v451 = vlaneseq
    %v452 = vshrl.u32 %v451, 7
    %v453 = vsub.s32 %v92, %v452
    %v454 = vrot.slane %v382, %v453
    %v455 = vlaneseq
    %v456 = vshrl.u32 %v455, 7
    %v457 = vsub.s32 %v390, %v456
    %v458 = vrot.slane %v385, %v457
    %v459 = vsel %vm395, %v458, %v454
    %v460 = vsel %vm102, %v405, %v396
    %v461 = vsel %vm105, %v414, %v460
    %v462 = vsel %vm108, %v423, %v461
    %v463 = vsel %vm111, %v432, %v462
    %v464 = vsel %vm114, %v441, %v463
    %v465 = vsel %vm117, %v450, %v464
    %v466 = vsel %vm120, %v459, %v465
    %vm468 = vcmask 130048
    %v469 = vsel %vm468, %v466, inf
    %470 = vmin.xlane.f32.xlu0 %v469
    %v471 = vpop.xlane.xlu0 %470
    %v473 = vlaneseq
    %v474 = vshrl.u32 %v473, 7
    %v475 = vsub.s32 0, %v474
    %v476 = vrot.slane %v471, %v475
    %v477 = vlaneseq
    %v478 = vshrl.u32 %v477, 7
    %v479 = vsub.s32 1, %v478
    %v480 = vrot.slane %v471, %v479
    %v481 = vlaneseq
    %v482 = vshrl.u32 %v481, 7
    %v483 = vsub.s32 2, %v482
    %v484 = vrot.slane %v471, %v483
    %v485 = vlaneseq
    %v486 = vshrl.u32 %v485, 7
    %v487 = vsub.s32 3, %v486
    %v488 = vrot.slane %v471, %v487
    %v489 = vlaneseq
    %v490 = vshrl.u32 %v489, 7
    %v491 = vsub.s32 4, %v490
    %v492 = vrot.slane %v471, %v491
    %v493 = vlaneseq
    %v494 = vshrl.u32 %v493, 7
    %v495 = vsub.s32 5, %v494
    %v496 = vrot.slane %v471, %v495
    %v497 = vlaneseq
    %v498 = vshrl.u32 %v497, 7
    %v499 = vsub.s32 6, %v498
    %v500 = vrot.slane %v471, %v499
    %v501 = vlaneseq
    %v502 = vshrl.u32 %v501, 7
    %v503 = vsub.s32 7, %v502
    %v504 = vrot.slane %v471, %v503
    %vm513 = vcmp.le.f32.partialorder %v306, %v476
    %vm514 = vcmp.le.f32.partialorder %v307, %v476
    %vm515 = vcmp.le.f32.partialorder %v308, %v480
    %vm516 = vcmp.le.f32.partialorder %v309, %v480
    %vm517 = vcmp.le.f32.partialorder %v310, %v484
    %vm518 = vcmp.le.f32.partialorder %v311, %v484
    %vm519 = vcmp.le.f32.partialorder %v312, %v488
    %vm520 = vcmp.le.f32.partialorder %v313, %v488
    %vm521 = vcmp.le.f32.partialorder %v314, %v492
    %vm522 = vcmp.le.f32.partialorder %v315, %v492
    %vm523 = vcmp.le.f32.partialorder %v316, %v496
    %vm524 = vcmp.le.f32.partialorder %v317, %v496
    %vm525 = vcmp.le.f32.partialorder %v318, %v500
    %vm526 = vcmp.le.f32.partialorder %v319, %v500
    %vm527 = vcmp.le.f32.partialorder %v320, %v504
    %vm528 = vcmp.le.f32.partialorder %v321, %v504
    %530 = vbcast.lane.b32.xlu0 %v92, 256
    %v531 = vpop.permute.xlu0 %530
    %s533 = sor.u32 256, 8
    %534 = vbcast.lane.b32.xlu0 %v92, %s533
    %v535 = vpop.permute.xlu0 %534
    %v536 = vsel %vm513, %v531, 16
    %v537 = vsel %vm514, %v535, 16
    %v538 = vsel %vm515, %v531, 16
    %v539 = vsel %vm516, %v535, 16
    %v540 = vsel %vm517, %v531, 16
    %v541 = vsel %vm518, %v535, 16
    %v542 = vsel %vm519, %v531, 16
    %v543 = vsel %vm520, %v535, 16
    %v544 = vsel %vm521, %v531, 16
    %v545 = vsel %vm522, %v535, 16
    %v546 = vsel %vm523, %v531, 16
    %v547 = vsel %vm524, %v535, 16
    %v548 = vsel %vm525, %v531, 16
    %v549 = vsel %vm526, %v535, 16
    %v550 = vsel %vm527, %v531, 16
    %v551 = vsel %vm528, %v535, 16
    %552 = vset.pattern.permute.xlu0 0
    %553 = vperm.xlu0 %552, %v536
    %v554 = vpop.permute.xlu0 %553
    %555 = vset.pattern.permute.xlu0 0
    %556 = vperm.xlu0 %555, %v537
    %v557 = vpop.permute.xlu0 %556
    %558 = vset.pattern.permute.xlu0 0
    %559 = vperm.xlu0 %558, %v538
    %v560 = vpop.permute.xlu0 %559
    %561 = vset.pattern.permute.xlu0 0
    %562 = vperm.xlu0 %561, %v539
    %v563 = vpop.permute.xlu0 %562
    %564 = vset.pattern.permute.xlu0 0
    %565 = vperm.xlu0 %564, %v540
    %v566 = vpop.permute.xlu0 %565
    %567 = vset.pattern.permute.xlu0 0
    %568 = vperm.xlu0 %567, %v541
    %v569 = vpop.permute.xlu0 %568
    %570 = vset.pattern.permute.xlu0 0
    %571 = vperm.xlu0 %570, %v542
    %v572 = vpop.permute.xlu0 %571
    %573 = vset.pattern.permute.xlu0 0
    %574 = vperm.xlu0 %573, %v543
    %v575 = vpop.permute.xlu0 %574
    %576 = vset.pattern.permute.xlu0 0
    %577 = vperm.xlu0 %576, %v544
    %v578 = vpop.permute.xlu0 %577
    %579 = vset.pattern.permute.xlu0 0
    %580 = vperm.xlu0 %579, %v545
    %v581 = vpop.permute.xlu0 %580
    %582 = vset.pattern.permute.xlu0 0
    %583 = vperm.xlu0 %582, %v546
    %v584 = vpop.permute.xlu0 %583
    %585 = vset.pattern.permute.xlu0 0
    %586 = vperm.xlu0 %585, %v547
    %v587 = vpop.permute.xlu0 %586
    %588 = vset.pattern.permute.xlu0 0
    %589 = vperm.xlu0 %588, %v548
    %v590 = vpop.permute.xlu0 %589
    %591 = vset.pattern.permute.xlu0 0
    %592 = vperm.xlu0 %591, %v549
    %v593 = vpop.permute.xlu0 %592
    %594 = vset.pattern.permute.xlu0 0
    %595 = vperm.xlu0 %594, %v550
    %v596 = vpop.permute.xlu0 %595
    %597 = vset.pattern.permute.xlu0 0
    %598 = vperm.xlu0 %597, %v551
    %v599 = vpop.permute.xlu0 %598
    %v600 = vlaneseq
    %v601 = vshrl.u32 %v600, 7
    %v602 = vsub.s32 %v92, %v601
    %v603 = vrot.slane %v554, %v602
    %v604 = vlaneseq
    %v605 = vshrl.u32 %v604, 7
    %v606 = vsub.s32 %v390, %v605
    %v607 = vrot.slane %v557, %v606
    %v608 = vsel %vm395, %v607, %v603
    %v609 = vlaneseq
    %v610 = vshrl.u32 %v609, 7
    %v611 = vsub.s32 %v92, %v610
    %v612 = vrot.slane %v560, %v611
    %v613 = vlaneseq
    %v614 = vshrl.u32 %v613, 7
    %v615 = vsub.s32 %v390, %v614
    %v616 = vrot.slane %v563, %v615
    %v617 = vsel %vm395, %v616, %v612
    %v618 = vlaneseq
    %v619 = vshrl.u32 %v618, 7
    %v620 = vsub.s32 %v92, %v619
    %v621 = vrot.slane %v566, %v620
    %v622 = vlaneseq
    %v623 = vshrl.u32 %v622, 7
    %v624 = vsub.s32 %v390, %v623
    %v625 = vrot.slane %v569, %v624
    %v626 = vsel %vm395, %v625, %v621
    %v627 = vlaneseq
    %v628 = vshrl.u32 %v627, 7
    %v629 = vsub.s32 %v92, %v628
    %v630 = vrot.slane %v572, %v629
    %v631 = vlaneseq
    %v632 = vshrl.u32 %v631, 7
    %v633 = vsub.s32 %v390, %v632
    %v634 = vrot.slane %v575, %v633
    %v635 = vsel %vm395, %v634, %v630
    %v636 = vlaneseq
    %v637 = vshrl.u32 %v636, 7
    %v638 = vsub.s32 %v92, %v637
    %v639 = vrot.slane %v578, %v638
    %v640 = vlaneseq
    %v641 = vshrl.u32 %v640, 7
    %v642 = vsub.s32 %v390, %v641
    %v643 = vrot.slane %v581, %v642
    %v644 = vsel %vm395, %v643, %v639
    %v645 = vlaneseq
    %v646 = vshrl.u32 %v645, 7
    %v647 = vsub.s32 %v92, %v646
    %v648 = vrot.slane %v584, %v647
    %v649 = vlaneseq
    %v650 = vshrl.u32 %v649, 7
    %v651 = vsub.s32 %v390, %v650
    %v652 = vrot.slane %v587, %v651
    %v653 = vsel %vm395, %v652, %v648
    %v654 = vlaneseq
    %v655 = vshrl.u32 %v654, 7
    %v656 = vsub.s32 %v92, %v655
    %v657 = vrot.slane %v590, %v656
    %v658 = vlaneseq
    %v659 = vshrl.u32 %v658, 7
    %v660 = vsub.s32 %v390, %v659
    %v661 = vrot.slane %v593, %v660
    %v662 = vsel %vm395, %v661, %v657
    %v663 = vlaneseq
    %v664 = vshrl.u32 %v663, 7
    %v665 = vsub.s32 %v92, %v664
    %v666 = vrot.slane %v596, %v665
    %v667 = vlaneseq
    %v668 = vshrl.u32 %v667, 7
    %v669 = vsub.s32 %v390, %v668
    %v670 = vrot.slane %v599, %v669
    %v671 = vsel %vm395, %v670, %v666
    %v672 = vsel %vm102, %v617, %v608
    %v673 = vsel %vm105, %v626, %v672
    %v674 = vsel %vm108, %v635, %v673
    %v675 = vsel %vm111, %v644, %v674
    %v676 = vsel %vm114, %v653, %v675
    %v677 = vsel %vm117, %v662, %v676
    %v678 = vsel %vm120, %v671, %v677
    %v679 = vsel %vm468, %v678, 2147483647
    %v680 = vand.u32 %v679, 65535
    %v681 = vshra.s32 %v679, 16
    %v682 = vcvt.s32.f32 %v680
    %v683 = vcvt.s32.f32 %v681
    %684 = vmin.xlane.f32.xlu0 %v683
    %v685 = vpop.xlane.xlu0 %684
    %vm686 = vcmp.eq.f32.partialorder %v683, %v685
    %v687 = vsel %vm686, %v682, inf
    %688 = vmin.xlane.f32.xlu0 %v687
    %v689 = vpop.xlane.xlu0 %688
    %v690 = vcvt.f32.s32 %v689
    %v691 = vcvt.f32.s32 %v685
    %v692 = vshll.u32 %v691, 16
    %v693 = vadd.s32 %v692, %v690
    %vm694 = vcmp.eq.s32.totalorder %v92, %v693
    %v695 = vsel %vm694, 1, 0
    %v696 = vcvt.s32.f32 %v695
    %v698 = vsel %vm468, %v696, 0
    %700 = vmatprep.subr.mxu0 0.0
    %701 = vmatpush1.msra.mxu0 %v50
    %702 = vmatprep.subr.mxu0 0.0
    %703 = vmatpush1.msra.mxu0 %v51
    %704 = vmatprep.subr.mxu0 0.0
    %705 = vmatpush1.msra.mxu0 0.0
    %706 = vmatprep.subr.mxu0 0.0
    %707 = vmatpush1.msra.mxu0 0.0
    %708 = vmatprep.subr.mxu0 0.0
    %709 = vmatpush1.msra.mxu0 0.0
    %710 = vmatprep.subr.mxu0 0.0
    %711 = vmatpush1.msra.mxu0 0.0
    %712 = vmatprep.subr.mxu0 0.0
    %713 = vmatpush1.msra.mxu0 0.0
    %714 = vmatprep.subr.mxu0 0.0
    %715 = vmatpush1.msra.mxu0 0.0
    %716 = vmatprep.subr.mxu0 0.0
    %717 = vmatpush1.msra.mxu0 0.0
    %718 = vmatprep.subr.mxu0 0.0
    %719 = vmatpush1.msra.mxu0 0.0
    %720 = vmatprep.subr.mxu0 0.0
    %721 = vmatpush1.msra.mxu0 0.0
    %722 = vmatprep.subr.mxu0 0.0
    %723 = vmatpush1.msra.mxu0 0.0
    %724 = vmatprep.subr.mxu0 0.0
    %725 = vmatpush1.msra.mxu0 0.0
    %726 = vmatprep.subr.mxu0 0.0
    %727 = vmatpush1.msra.mxu0 0.0
    %728 = vmatprep.subr.mxu0 0.0
    %729 = vmatpush1.msra.mxu0 0.0
    %730 = vmatprep.subr.mxu0 0.0
    %731 = vmatpush1.msra.mxu0 0.0
    %732 = vmatprep.subr.mxu0 0.0
    %733 = vmatpush1.msra.mxu0 0.0
    %734 = vmatprep.subr.mxu0 0.0
    %735 = vmatpush1.msra.mxu0 0.0
    %736 = vmatprep.subr.mxu0 0.0
    %737 = vmatpush1.msra.mxu0 0.0
    %738 = vmatprep.subr.mxu0 0.0
    %739 = vmatpush1.msra.mxu0 0.0
    %740 = vmatprep.subr.mxu0 0.0
    %741 = vmatpush1.msra.mxu0 0.0
    %742 = vmatprep.subr.mxu0 0.0
    %743 = vmatpush1.msra.mxu0 0.0
    %744 = vmatprep.subr.mxu0 0.0
    %745 = vmatpush1.msra.mxu0 0.0
    %746 = vmatprep.subr.mxu0 0.0
    %747 = vmatpush1.msra.mxu0 0.0
    %748 = vmatprep.subr.mxu0 0.0
    %749 = vmatpush1.msra.mxu0 0.0
    %750 = vmatprep.subr.mxu0 0.0
    %751 = vmatpush1.msra.mxu0 0.0
    %752 = vmatprep.subr.mxu0 0.0
    %753 = vmatpush1.msra.mxu0 0.0
    %754 = vmatprep.subr.mxu0 0.0
    %755 = vmatpush1.msra.mxu0 0.0
    %756 = vmatprep.subr.mxu0 0.0
    %757 = vmatpush1.msra.mxu0 0.0
    %758 = vmatprep.subr.mxu0 0.0
    %759 = vmatpush1.msra.mxu0 0.0
    %760 = vmatprep.subr.mxu0 0.0
    %761 = vmatpush1.msra.mxu0 0.0
    %762 = vmatprep.subr.mxu0 0.0
    %763 = vmatpush1.msra.mxu0 0.0
    %764 = vmatprep.mubr.f32.mxu0 0.0
    %765 = vmatmul.mubr.f32.gmra.mrb[0].mxu0 %v698
    %v766 = vpop.f32.mrb[0].mxu0
    %v767 = vadd.f32 0.0, %v766
    %v768 = vpop.f32.mrb[0].mxu0
    %769 = vdwg.mxu0
    %v770 = vrot.slane %v42, 1
    %v771 = vsel %vm102, %v43, %v770
    %v772 = vrot.slane %v44, 7
    %v773 = vsel %vm105, %v772, %v771
    %v774 = vrot.slane %v45, 6
    %v775 = vsel %vm108, %v774, %v773
    %v776 = vrot.slane %v46, 5
    %v777 = vsel %vm111, %v776, %v775
    %v778 = vrot.slane %v47, 4
    %v779 = vsel %vm114, %v778, %v777
    %v780 = vrot.slane %v48, 3
    %v781 = vsel %vm117, %v780, %v779
    %v782 = vrot.slane %v49, 2
    %v783 = vsel %vm120, %v782, %v781
    %v784 = vsel %vm66, %v783, 0
    %v787 = vsel %vm66, %v52, 0
    %v790 = vsel %vm66, %v53, 0
    %792 = vmatprep.subr.mxu0 0.0
    %793 = vmatpush1.xpose.msra.mxu0 %v787
    %794 = vmatprep.subr.mxu0 0.0
    %795 = vmatpush1.xpose.msra.mxu0 %v790
    %796 = vmatprep.subr.mxu0 0.0
    %797 = vmatpush1.xpose.msra.mxu0 0.0
    %798 = vmatprep.subr.mxu0 0.0
    %799 = vmatpush1.xpose.msra.mxu0 0.0
    %800 = vmatprep.subr.mxu0 0.0
    %801 = vmatpush1.xpose.msra.mxu0 0.0
    %802 = vmatprep.subr.mxu0 0.0
    %803 = vmatpush1.xpose.msra.mxu0 0.0
    %804 = vmatprep.subr.mxu0 0.0
    %805 = vmatpush1.xpose.msra.mxu0 0.0
    %806 = vmatprep.subr.mxu0 0.0
    %807 = vmatpush1.xpose.msra.mxu0 0.0
    %808 = vmatprep.subr.mxu0 0.0
    %809 = vmatpush1.xpose.msra.mxu0 0.0
    %810 = vmatprep.subr.mxu0 0.0
    %811 = vmatpush1.xpose.msra.mxu0 0.0
    %812 = vmatprep.subr.mxu0 0.0
    %813 = vmatpush1.xpose.msra.mxu0 0.0
    %814 = vmatprep.subr.mxu0 0.0
    %815 = vmatpush1.xpose.msra.mxu0 0.0
    %816 = vmatprep.subr.mxu0 0.0
    %817 = vmatpush1.xpose.msra.mxu0 0.0
    %818 = vmatprep.subr.mxu0 0.0
    %819 = vmatpush1.xpose.msra.mxu0 0.0
    %820 = vmatprep.subr.mxu0 0.0
    %821 = vmatpush1.xpose.msra.mxu0 0.0
    %822 = vmatprep.subr.mxu0 0.0
    %823 = vmatpush1.xpose.msra.mxu0 0.0
    %824 = vmatprep.subr.mxu0 0.0
    %825 = vmatpush1.xpose.msra.mxu0 0.0
    %826 = vmatprep.subr.mxu0 0.0
    %827 = vmatpush1.xpose.msra.mxu0 0.0
    %828 = vmatprep.subr.mxu0 0.0
    %829 = vmatpush1.xpose.msra.mxu0 0.0
    %830 = vmatprep.subr.mxu0 0.0
    %831 = vmatpush1.xpose.msra.mxu0 0.0
    %832 = vmatprep.subr.mxu0 0.0
    %833 = vmatpush1.xpose.msra.mxu0 0.0
    %834 = vmatprep.subr.mxu0 0.0
    %835 = vmatpush1.xpose.msra.mxu0 0.0
    %836 = vmatprep.subr.mxu0 0.0
    %837 = vmatpush1.xpose.msra.mxu0 0.0
    %838 = vmatprep.subr.mxu0 0.0
    %839 = vmatpush1.xpose.msra.mxu0 0.0
    %840 = vmatprep.subr.mxu0 0.0
    %841 = vmatpush1.xpose.msra.mxu0 0.0
    %842 = vmatprep.subr.mxu0 0.0
    %843 = vmatpush1.xpose.msra.mxu0 0.0
    %844 = vmatprep.subr.mxu0 0.0
    %845 = vmatpush1.xpose.msra.mxu0 0.0
    %846 = vmatprep.subr.mxu0 0.0
    %847 = vmatpush1.xpose.msra.mxu0 0.0
    %848 = vmatprep.subr.mxu0 0.0
    %849 = vmatpush1.xpose.msra.mxu0 0.0
    %850 = vmatprep.subr.mxu0 0.0
    %851 = vmatpush1.xpose.msra.mxu0 0.0
    %852 = vmatprep.subr.mxu0 0.0
    %853 = vmatpush1.xpose.msra.mxu0 0.0
    %854 = vmatprep.subr.mxu0 0.0
    %855 = vmatpush1.xpose.msra.mxu0 0.0
    %856 = vmatprep.mubr.f32.mxu0 0.0
    %857 = vmatmul.mubr.f32.gmra.mrb[0].mxu0 %v784
    %v858 = vpop.f32.mrb[0].mxu0
    %v859 = vadd.f32 0.0, %v858
    %v860 = vpop.f32.mrb[0].mxu0
    %861 = vdwg.mxu0
    %v862 = vmul.f32 %v859, 2.0
    %v864 = vlaneseq
    %v865 = vshrl.u32 %v864, 7
    %v866 = vsub.s32 0, %v865
    %v867 = vrot.slane %v862, %v866
    %869 = vbcast.lane.b32.xlu0 %v867, 256
    %v870 = vpop.permute.xlu0 %869
    %s872 = sor.u32 256, 8
    %873 = vbcast.lane.b32.xlu0 %v867, %s872
    %v874 = vpop.permute.xlu0 %873
    %v875 = vlaneseq
    %v876 = vshrl.u32 %v875, 7
    %v877 = vsub.s32 1, %v876
    %v878 = vrot.slane %v862, %v877
    %880 = vbcast.lane.b32.xlu0 %v878, 256
    %v881 = vpop.permute.xlu0 %880
    %s883 = sor.u32 256, 8
    %884 = vbcast.lane.b32.xlu0 %v878, %s883
    %v885 = vpop.permute.xlu0 %884
    %v886 = vlaneseq
    %v887 = vshrl.u32 %v886, 7
    %v888 = vsub.s32 2, %v887
    %v889 = vrot.slane %v862, %v888
    %891 = vbcast.lane.b32.xlu0 %v889, 256
    %v892 = vpop.permute.xlu0 %891
    %s894 = sor.u32 256, 8
    %895 = vbcast.lane.b32.xlu0 %v889, %s894
    %v896 = vpop.permute.xlu0 %895
    %v897 = vlaneseq
    %v898 = vshrl.u32 %v897, 7
    %v899 = vsub.s32 3, %v898
    %v900 = vrot.slane %v862, %v899
    %902 = vbcast.lane.b32.xlu0 %v900, 256
    %v903 = vpop.permute.xlu0 %902
    %s905 = sor.u32 256, 8
    %906 = vbcast.lane.b32.xlu0 %v900, %s905
    %v907 = vpop.permute.xlu0 %906
    %v908 = vlaneseq
    %v909 = vshrl.u32 %v908, 7
    %v910 = vsub.s32 4, %v909
    %v911 = vrot.slane %v862, %v910
    %913 = vbcast.lane.b32.xlu0 %v911, 256
    %v914 = vpop.permute.xlu0 %913
    %s916 = sor.u32 256, 8
    %917 = vbcast.lane.b32.xlu0 %v911, %s916
    %v918 = vpop.permute.xlu0 %917
    %v919 = vlaneseq
    %v920 = vshrl.u32 %v919, 7
    %v921 = vsub.s32 5, %v920
    %v922 = vrot.slane %v862, %v921
    %924 = vbcast.lane.b32.xlu0 %v922, 256
    %v925 = vpop.permute.xlu0 %924
    %s927 = sor.u32 256, 8
    %928 = vbcast.lane.b32.xlu0 %v922, %s927
    %v929 = vpop.permute.xlu0 %928
    %v930 = vlaneseq
    %v931 = vshrl.u32 %v930, 7
    %v932 = vsub.s32 6, %v931
    %v933 = vrot.slane %v862, %v932
    %935 = vbcast.lane.b32.xlu0 %v933, 256
    %v936 = vpop.permute.xlu0 %935
    %s938 = sor.u32 256, 8
    %939 = vbcast.lane.b32.xlu0 %v933, %s938
    %v940 = vpop.permute.xlu0 %939
    %v941 = vlaneseq
    %v942 = vshrl.u32 %v941, 7
    %v943 = vsub.s32 7, %v942
    %v944 = vrot.slane %v862, %v943
    %946 = vbcast.lane.b32.xlu0 %v944, 256
    %v947 = vpop.permute.xlu0 %946
    %s949 = sor.u32 256, 8
    %950 = vbcast.lane.b32.xlu0 %v944, %s949
    %v951 = vpop.permute.xlu0 %950
    %v968 = vsub.f32 %v75, %v870
    %v969 = vsub.f32 %v78, %v874
    %v970 = vsub.f32 %v75, %v881
    %v971 = vsub.f32 %v78, %v885
    %v972 = vsub.f32 %v75, %v892
    %v973 = vsub.f32 %v78, %v896
    %v974 = vsub.f32 %v75, %v903
    %v975 = vsub.f32 %v78, %v907
    %v976 = vsub.f32 %v75, %v914
    %v977 = vsub.f32 %v78, %v918
    %v978 = vsub.f32 %v75, %v925
    %v979 = vsub.f32 %v78, %v929
    %v980 = vsub.f32 %v75, %v936
    %v981 = vsub.f32 %v78, %v940
    %v982 = vsub.f32 %v75, %v947
    %v983 = vsub.f32 %v78, %v951
    %1000 = vset.pattern.permute.xlu0 0
    %1001 = vperm.xlu0 %1000, %v968
    %v1002 = vpop.permute.xlu0 %1001
    %1003 = vset.pattern.permute.xlu0 0
    %1004 = vperm.xlu0 %1003, %v969
    %v1005 = vpop.permute.xlu0 %1004
    %1006 = vset.pattern.permute.xlu0 0
    %1007 = vperm.xlu0 %1006, %v970
    %v1008 = vpop.permute.xlu0 %1007
    %1009 = vset.pattern.permute.xlu0 0
    %1010 = vperm.xlu0 %1009, %v971
    %v1011 = vpop.permute.xlu0 %1010
    %1012 = vset.pattern.permute.xlu0 0
    %1013 = vperm.xlu0 %1012, %v972
    %v1014 = vpop.permute.xlu0 %1013
    %1015 = vset.pattern.permute.xlu0 0
    %1016 = vperm.xlu0 %1015, %v973
    %v1017 = vpop.permute.xlu0 %1016
    %1018 = vset.pattern.permute.xlu0 0
    %1019 = vperm.xlu0 %1018, %v974
    %v1020 = vpop.permute.xlu0 %1019
    %1021 = vset.pattern.permute.xlu0 0
    %1022 = vperm.xlu0 %1021, %v975
    %v1023 = vpop.permute.xlu0 %1022
    %1024 = vset.pattern.permute.xlu0 0
    %1025 = vperm.xlu0 %1024, %v976
    %v1026 = vpop.permute.xlu0 %1025
    %1027 = vset.pattern.permute.xlu0 0
    %1028 = vperm.xlu0 %1027, %v977
    %v1029 = vpop.permute.xlu0 %1028
    %1030 = vset.pattern.permute.xlu0 0
    %1031 = vperm.xlu0 %1030, %v978
    %v1032 = vpop.permute.xlu0 %1031
    %1033 = vset.pattern.permute.xlu0 0
    %1034 = vperm.xlu0 %1033, %v979
    %v1035 = vpop.permute.xlu0 %1034
    %1036 = vset.pattern.permute.xlu0 0
    %1037 = vperm.xlu0 %1036, %v980
    %v1038 = vpop.permute.xlu0 %1037
    %1039 = vset.pattern.permute.xlu0 0
    %1040 = vperm.xlu0 %1039, %v981
    %v1041 = vpop.permute.xlu0 %1040
    %1042 = vset.pattern.permute.xlu0 0
    %1043 = vperm.xlu0 %1042, %v982
    %v1044 = vpop.permute.xlu0 %1043
    %1045 = vset.pattern.permute.xlu0 0
    %1046 = vperm.xlu0 %1045, %v983
    %v1047 = vpop.permute.xlu0 %1046
    %v1048 = vlaneseq
    %v1049 = vshrl.u32 %v1048, 7
    %v1050 = vsub.s32 %v92, %v1049
    %v1051 = vrot.slane %v1002, %v1050
    %v1052 = vlaneseq
    %v1053 = vshrl.u32 %v1052, 7
    %v1054 = vsub.s32 %v390, %v1053
    %v1055 = vrot.slane %v1005, %v1054
    %v1056 = vsel %vm395, %v1055, %v1051
    %v1057 = vlaneseq
    %v1058 = vshrl.u32 %v1057, 7
    %v1059 = vsub.s32 %v92, %v1058
    %v1060 = vrot.slane %v1008, %v1059
    %v1061 = vlaneseq
    %v1062 = vshrl.u32 %v1061, 7
    %v1063 = vsub.s32 %v390, %v1062
    %v1064 = vrot.slane %v1011, %v1063
    %v1065 = vsel %vm395, %v1064, %v1060
    %v1066 = vlaneseq
    %v1067 = vshrl.u32 %v1066, 7
    %v1068 = vsub.s32 %v92, %v1067
    %v1069 = vrot.slane %v1014, %v1068
    %v1070 = vlaneseq
    %v1071 = vshrl.u32 %v1070, 7
    %v1072 = vsub.s32 %v390, %v1071
    %v1073 = vrot.slane %v1017, %v1072
    %v1074 = vsel %vm395, %v1073, %v1069
    %v1075 = vlaneseq
    %v1076 = vshrl.u32 %v1075, 7
    %v1077 = vsub.s32 %v92, %v1076
    %v1078 = vrot.slane %v1020, %v1077
    %v1079 = vlaneseq
    %v1080 = vshrl.u32 %v1079, 7
    %v1081 = vsub.s32 %v390, %v1080
    %v1082 = vrot.slane %v1023, %v1081
    %v1083 = vsel %vm395, %v1082, %v1078
    %v1084 = vlaneseq
    %v1085 = vshrl.u32 %v1084, 7
    %v1086 = vsub.s32 %v92, %v1085
    %v1087 = vrot.slane %v1026, %v1086
    %v1088 = vlaneseq
    %v1089 = vshrl.u32 %v1088, 7
    %v1090 = vsub.s32 %v390, %v1089
    %v1091 = vrot.slane %v1029, %v1090
    %v1092 = vsel %vm395, %v1091, %v1087
    %v1093 = vlaneseq
    %v1094 = vshrl.u32 %v1093, 7
    %v1095 = vsub.s32 %v92, %v1094
    %v1096 = vrot.slane %v1032, %v1095
    %v1097 = vlaneseq
    %v1098 = vshrl.u32 %v1097, 7
    %v1099 = vsub.s32 %v390, %v1098
    %v1100 = vrot.slane %v1035, %v1099
    %v1101 = vsel %vm395, %v1100, %v1096
    %v1102 = vlaneseq
    %v1103 = vshrl.u32 %v1102, 7
    %v1104 = vsub.s32 %v92, %v1103
    %v1105 = vrot.slane %v1038, %v1104
    %v1106 = vlaneseq
    %v1107 = vshrl.u32 %v1106, 7
    %v1108 = vsub.s32 %v390, %v1107
    %v1109 = vrot.slane %v1041, %v1108
    %v1110 = vsel %vm395, %v1109, %v1105
    %v1111 = vlaneseq
    %v1112 = vshrl.u32 %v1111, 7
    %v1113 = vsub.s32 %v92, %v1112
    %v1114 = vrot.slane %v1044, %v1113
    %v1115 = vlaneseq
    %v1116 = vshrl.u32 %v1115, 7
    %v1117 = vsub.s32 %v390, %v1116
    %v1118 = vrot.slane %v1047, %v1117
    %v1119 = vsel %vm395, %v1118, %v1114
    %v1120 = vsel %vm102, %v1065, %v1056
    %v1121 = vsel %vm105, %v1074, %v1120
    %v1122 = vsel %vm108, %v1083, %v1121
    %v1123 = vsel %vm111, %v1092, %v1122
    %v1124 = vsel %vm114, %v1101, %v1123
    %v1125 = vsel %vm117, %v1110, %v1124
    %v1126 = vsel %vm120, %v1119, %v1125
    %v1128 = vsel %vm468, %v1126, inf
    %1129 = vmin.xlane.f32.xlu0 %v1128
    %v1130 = vpop.xlane.xlu0 %1129
    %v1132 = vlaneseq
    %v1133 = vshrl.u32 %v1132, 7
    %v1134 = vsub.s32 0, %v1133
    %v1135 = vrot.slane %v1130, %v1134
    %v1136 = vlaneseq
    %v1137 = vshrl.u32 %v1136, 7
    %v1138 = vsub.s32 1, %v1137
    %v1139 = vrot.slane %v1130, %v1138
    %v1140 = vlaneseq
    %v1141 = vshrl.u32 %v1140, 7
    %v1142 = vsub.s32 2, %v1141
    %v1143 = vrot.slane %v1130, %v1142
    %v1144 = vlaneseq
    %v1145 = vshrl.u32 %v1144, 7
    %v1146 = vsub.s32 3, %v1145
    %v1147 = vrot.slane %v1130, %v1146
    %v1148 = vlaneseq
    %v1149 = vshrl.u32 %v1148, 7
    %v1150 = vsub.s32 4, %v1149
    %v1151 = vrot.slane %v1130, %v1150
    %v1152 = vlaneseq
    %v1153 = vshrl.u32 %v1152, 7
    %v1154 = vsub.s32 5, %v1153
    %v1155 = vrot.slane %v1130, %v1154
    %v1156 = vlaneseq
    %v1157 = vshrl.u32 %v1156, 7
    %v1158 = vsub.s32 6, %v1157
    %v1159 = vrot.slane %v1130, %v1158
    %v1160 = vlaneseq
    %v1161 = vshrl.u32 %v1160, 7
    %v1162 = vsub.s32 7, %v1161
    %v1163 = vrot.slane %v1130, %v1162
    %vm1172 = vcmp.le.f32.partialorder %v968, %v1135
    %vm1173 = vcmp.le.f32.partialorder %v969, %v1135
    %vm1174 = vcmp.le.f32.partialorder %v970, %v1139
    %vm1175 = vcmp.le.f32.partialorder %v971, %v1139
    %vm1176 = vcmp.le.f32.partialorder %v972, %v1143
    %vm1177 = vcmp.le.f32.partialorder %v973, %v1143
    %vm1178 = vcmp.le.f32.partialorder %v974, %v1147
    %vm1179 = vcmp.le.f32.partialorder %v975, %v1147
    %vm1180 = vcmp.le.f32.partialorder %v976, %v1151
    %vm1181 = vcmp.le.f32.partialorder %v977, %v1151
    %vm1182 = vcmp.le.f32.partialorder %v978, %v1155
    %vm1183 = vcmp.le.f32.partialorder %v979, %v1155
    %vm1184 = vcmp.le.f32.partialorder %v980, %v1159
    %vm1185 = vcmp.le.f32.partialorder %v981, %v1159
    %vm1186 = vcmp.le.f32.partialorder %v982, %v1163
    %vm1187 = vcmp.le.f32.partialorder %v983, %v1163
    %v1188 = vsel %vm1172, %v531, 16
    %v1189 = vsel %vm1173, %v535, 16
    %v1190 = vsel %vm1174, %v531, 16
    %v1191 = vsel %vm1175, %v535, 16
    %v1192 = vsel %vm1176, %v531, 16
    %v1193 = vsel %vm1177, %v535, 16
    %v1194 = vsel %vm1178, %v531, 16
    %v1195 = vsel %vm1179, %v535, 16
    %v1196 = vsel %vm1180, %v531, 16
    %v1197 = vsel %vm1181, %v535, 16
    %v1198 = vsel %vm1182, %v531, 16
    %v1199 = vsel %vm1183, %v535, 16
    %v1200 = vsel %vm1184, %v531, 16
    %v1201 = vsel %vm1185, %v535, 16
    %v1202 = vsel %vm1186, %v531, 16
    %v1203 = vsel %vm1187, %v535, 16
    %1204 = vset.pattern.permute.xlu0 0
    %1205 = vperm.xlu0 %1204, %v1188
    %v1206 = vpop.permute.xlu0 %1205
    %1207 = vset.pattern.permute.xlu0 0
    %1208 = vperm.xlu0 %1207, %v1189
    %v1209 = vpop.permute.xlu0 %1208
    %1210 = vset.pattern.permute.xlu0 0
    %1211 = vperm.xlu0 %1210, %v1190
    %v1212 = vpop.permute.xlu0 %1211
    %1213 = vset.pattern.permute.xlu0 0
    %1214 = vperm.xlu0 %1213, %v1191
    %v1215 = vpop.permute.xlu0 %1214
    %1216 = vset.pattern.permute.xlu0 0
    %1217 = vperm.xlu0 %1216, %v1192
    %v1218 = vpop.permute.xlu0 %1217
    %1219 = vset.pattern.permute.xlu0 0
    %1220 = vperm.xlu0 %1219, %v1193
    %v1221 = vpop.permute.xlu0 %1220
    %1222 = vset.pattern.permute.xlu0 0
    %1223 = vperm.xlu0 %1222, %v1194
    %v1224 = vpop.permute.xlu0 %1223
    %1225 = vset.pattern.permute.xlu0 0
    %1226 = vperm.xlu0 %1225, %v1195
    %v1227 = vpop.permute.xlu0 %1226
    %1228 = vset.pattern.permute.xlu0 0
    %1229 = vperm.xlu0 %1228, %v1196
    %v1230 = vpop.permute.xlu0 %1229
    %1231 = vset.pattern.permute.xlu0 0
    %1232 = vperm.xlu0 %1231, %v1197
    %v1233 = vpop.permute.xlu0 %1232
    %1234 = vset.pattern.permute.xlu0 0
    %1235 = vperm.xlu0 %1234, %v1198
    %v1236 = vpop.permute.xlu0 %1235
    %1237 = vset.pattern.permute.xlu0 0
    %1238 = vperm.xlu0 %1237, %v1199
    %v1239 = vpop.permute.xlu0 %1238
    %1240 = vset.pattern.permute.xlu0 0
    %1241 = vperm.xlu0 %1240, %v1200
    %v1242 = vpop.permute.xlu0 %1241
    %1243 = vset.pattern.permute.xlu0 0
    %1244 = vperm.xlu0 %1243, %v1201
    %v1245 = vpop.permute.xlu0 %1244
    %1246 = vset.pattern.permute.xlu0 0
    %1247 = vperm.xlu0 %1246, %v1202
    %v1248 = vpop.permute.xlu0 %1247
    %1249 = vset.pattern.permute.xlu0 0
    %1250 = vperm.xlu0 %1249, %v1203
    %v1251 = vpop.permute.xlu0 %1250
    %v1252 = vlaneseq
    %v1253 = vshrl.u32 %v1252, 7
    %v1254 = vsub.s32 %v92, %v1253
    %v1255 = vrot.slane %v1206, %v1254
    %v1256 = vlaneseq
    %v1257 = vshrl.u32 %v1256, 7
    %v1258 = vsub.s32 %v390, %v1257
    %v1259 = vrot.slane %v1209, %v1258
    %v1260 = vsel %vm395, %v1259, %v1255
    %v1261 = vlaneseq
    %v1262 = vshrl.u32 %v1261, 7
    %v1263 = vsub.s32 %v92, %v1262
    %v1264 = vrot.slane %v1212, %v1263
    %v1265 = vlaneseq
    %v1266 = vshrl.u32 %v1265, 7
    %v1267 = vsub.s32 %v390, %v1266
    %v1268 = vrot.slane %v1215, %v1267
    %v1269 = vsel %vm395, %v1268, %v1264
    %v1270 = vlaneseq
    %v1271 = vshrl.u32 %v1270, 7
    %v1272 = vsub.s32 %v92, %v1271
    %v1273 = vrot.slane %v1218, %v1272
    %v1274 = vlaneseq
    %v1275 = vshrl.u32 %v1274, 7
    %v1276 = vsub.s32 %v390, %v1275
    %v1277 = vrot.slane %v1221, %v1276
    %v1278 = vsel %vm395, %v1277, %v1273
    %v1279 = vlaneseq
    %v1280 = vshrl.u32 %v1279, 7
    %v1281 = vsub.s32 %v92, %v1280
    %v1282 = vrot.slane %v1224, %v1281
    %v1283 = vlaneseq
    %v1284 = vshrl.u32 %v1283, 7
    %v1285 = vsub.s32 %v390, %v1284
    %v1286 = vrot.slane %v1227, %v1285
    %v1287 = vsel %vm395, %v1286, %v1282
    %v1288 = vlaneseq
    %v1289 = vshrl.u32 %v1288, 7
    %v1290 = vsub.s32 %v92, %v1289
    %v1291 = vrot.slane %v1230, %v1290
    %v1292 = vlaneseq
    %v1293 = vshrl.u32 %v1292, 7
    %v1294 = vsub.s32 %v390, %v1293
    %v1295 = vrot.slane %v1233, %v1294
    %v1296 = vsel %vm395, %v1295, %v1291
    %v1297 = vlaneseq
    %v1298 = vshrl.u32 %v1297, 7
    %v1299 = vsub.s32 %v92, %v1298
    %v1300 = vrot.slane %v1236, %v1299
    %v1301 = vlaneseq
    %v1302 = vshrl.u32 %v1301, 7
    %v1303 = vsub.s32 %v390, %v1302
    %v1304 = vrot.slane %v1239, %v1303
    %v1305 = vsel %vm395, %v1304, %v1300
    %v1306 = vlaneseq
    %v1307 = vshrl.u32 %v1306, 7
    %v1308 = vsub.s32 %v92, %v1307
    %v1309 = vrot.slane %v1242, %v1308
    %v1310 = vlaneseq
    %v1311 = vshrl.u32 %v1310, 7
    %v1312 = vsub.s32 %v390, %v1311
    %v1313 = vrot.slane %v1245, %v1312
    %v1314 = vsel %vm395, %v1313, %v1309
    %v1315 = vlaneseq
    %v1316 = vshrl.u32 %v1315, 7
    %v1317 = vsub.s32 %v92, %v1316
    %v1318 = vrot.slane %v1248, %v1317
    %v1319 = vlaneseq
    %v1320 = vshrl.u32 %v1319, 7
    %v1321 = vsub.s32 %v390, %v1320
    %v1322 = vrot.slane %v1251, %v1321
    %v1323 = vsel %vm395, %v1322, %v1318
    %v1324 = vsel %vm102, %v1269, %v1260
    %v1325 = vsel %vm105, %v1278, %v1324
    %v1326 = vsel %vm108, %v1287, %v1325
    %v1327 = vsel %vm111, %v1296, %v1326
    %v1328 = vsel %vm114, %v1305, %v1327
    %v1329 = vsel %vm117, %v1314, %v1328
    %v1330 = vsel %vm120, %v1323, %v1329
    %v1331 = vsel %vm468, %v1330, 2147483647
    %v1332 = vand.u32 %v1331, 65535
    %v1333 = vshra.s32 %v1331, 16
    %v1334 = vcvt.s32.f32 %v1332
    %v1335 = vcvt.s32.f32 %v1333
    %1336 = vmin.xlane.f32.xlu0 %v1335
    %v1337 = vpop.xlane.xlu0 %1336
    %vm1338 = vcmp.eq.f32.partialorder %v1335, %v1337
    %v1339 = vsel %vm1338, %v1334, inf
    %1340 = vmin.xlane.f32.xlu0 %v1339
    %v1341 = vpop.xlane.xlu0 %1340
    %v1342 = vcvt.f32.s32 %v1341
    %v1343 = vcvt.f32.s32 %v1337
    %v1344 = vshll.u32 %v1343, 16
    %v1345 = vadd.s32 %v1344, %v1342
    %vm1346 = vcmp.eq.s32.totalorder %v92, %v1345
    %v1347 = vsel %vm1346, 1, 0
    %v1348 = vcvt.s32.f32 %v1347
    %v1350 = vsel %vm468, %v1348, 0
    %1352 = vmatprep.subr.mxu0 0.0
    %1353 = vmatpush1.msra.mxu0 %v52
    %1354 = vmatprep.subr.mxu0 0.0
    %1355 = vmatpush1.msra.mxu0 %v53
    %1356 = vmatprep.subr.mxu0 0.0
    %1357 = vmatpush1.msra.mxu0 0.0
    %1358 = vmatprep.subr.mxu0 0.0
    %1359 = vmatpush1.msra.mxu0 0.0
    %1360 = vmatprep.subr.mxu0 0.0
    %1361 = vmatpush1.msra.mxu0 0.0
    %1362 = vmatprep.subr.mxu0 0.0
    %1363 = vmatpush1.msra.mxu0 0.0
    %1364 = vmatprep.subr.mxu0 0.0
    %1365 = vmatpush1.msra.mxu0 0.0
    %1366 = vmatprep.subr.mxu0 0.0
    %1367 = vmatpush1.msra.mxu0 0.0
    %1368 = vmatprep.subr.mxu0 0.0
    %1369 = vmatpush1.msra.mxu0 0.0
    %1370 = vmatprep.subr.mxu0 0.0
    %1371 = vmatpush1.msra.mxu0 0.0
    %1372 = vmatprep.subr.mxu0 0.0
    %1373 = vmatpush1.msra.mxu0 0.0
    %1374 = vmatprep.subr.mxu0 0.0
    %1375 = vmatpush1.msra.mxu0 0.0
    %1376 = vmatprep.subr.mxu0 0.0
    %1377 = vmatpush1.msra.mxu0 0.0
    %1378 = vmatprep.subr.mxu0 0.0
    %1379 = vmatpush1.msra.mxu0 0.0
    %1380 = vmatprep.subr.mxu0 0.0
    %1381 = vmatpush1.msra.mxu0 0.0
    %1382 = vmatprep.subr.mxu0 0.0
    %1383 = vmatpush1.msra.mxu0 0.0
    %1384 = vmatprep.subr.mxu0 0.0
    %1385 = vmatpush1.msra.mxu0 0.0
    %1386 = vmatprep.subr.mxu0 0.0
    %1387 = vmatpush1.msra.mxu0 0.0
    %1388 = vmatprep.subr.mxu0 0.0
    %1389 = vmatpush1.msra.mxu0 0.0
    %1390 = vmatprep.subr.mxu0 0.0
    %1391 = vmatpush1.msra.mxu0 0.0
    %1392 = vmatprep.subr.mxu0 0.0
    %1393 = vmatpush1.msra.mxu0 0.0
    %1394 = vmatprep.subr.mxu0 0.0
    %1395 = vmatpush1.msra.mxu0 0.0
    %1396 = vmatprep.subr.mxu0 0.0
    %1397 = vmatpush1.msra.mxu0 0.0
    %1398 = vmatprep.subr.mxu0 0.0
    %1399 = vmatpush1.msra.mxu0 0.0
    %1400 = vmatprep.subr.mxu0 0.0
    %1401 = vmatpush1.msra.mxu0 0.0
    %1402 = vmatprep.subr.mxu0 0.0
    %1403 = vmatpush1.msra.mxu0 0.0
    %1404 = vmatprep.subr.mxu0 0.0
    %1405 = vmatpush1.msra.mxu0 0.0
    %1406 = vmatprep.subr.mxu0 0.0
    %1407 = vmatpush1.msra.mxu0 0.0
    %1408 = vmatprep.subr.mxu0 0.0
    %1409 = vmatpush1.msra.mxu0 0.0
    %1410 = vmatprep.subr.mxu0 0.0
    %1411 = vmatpush1.msra.mxu0 0.0
    %1412 = vmatprep.subr.mxu0 0.0
    %1413 = vmatpush1.msra.mxu0 0.0
    %1414 = vmatprep.subr.mxu0 0.0
    %1415 = vmatpush1.msra.mxu0 0.0
    %1416 = vmatprep.mubr.f32.mxu0 0.0
    %1417 = vmatmul.mubr.f32.gmra.mrb[0].mxu0 %v1350
    %v1418 = vpop.f32.mrb[0].mxu0
    %v1419 = vadd.f32 0.0, %v1418
    %v1420 = vpop.f32.mrb[0].mxu0
    %1421 = vdwg.mxu0
    %v1422 = vrot.slane %v42, 2
    %v1423 = vrot.slane %v43, 1
    %v1424 = vsel %vm102, %v1423, %v1422
    %v1425 = vsel %vm105, %v44, %v1424
    %v1426 = vrot.slane %v45, 7
    %v1427 = vsel %vm108, %v1426, %v1425
    %v1428 = vrot.slane %v46, 6
    %v1429 = vsel %vm111, %v1428, %v1427
    %v1430 = vrot.slane %v47, 5
    %v1431 = vsel %vm114, %v1430, %v1429
    %v1432 = vrot.slane %v48, 4
    %v1433 = vsel %vm117, %v1432, %v1431
    %v1434 = vrot.slane %v49, 3
    %v1435 = vsel %vm120, %v1434, %v1433
    %v1436 = vsel %vm66, %v1435, 0
    %v1439 = vsel %vm66, %v54, 0
    %v1442 = vsel %vm66, %v55, 0
    %1444 = vmatprep.subr.mxu0 0.0
    %1445 = vmatpush1.xpose.msra.mxu0 %v1439
    %1446 = vmatprep.subr.mxu0 0.0
    %1447 = vmatpush1.xpose.msra.mxu0 %v1442
    %1448 = vmatprep.subr.mxu0 0.0
    %1449 = vmatpush1.xpose.msra.mxu0 0.0
    %1450 = vmatprep.subr.mxu0 0.0
    %1451 = vmatpush1.xpose.msra.mxu0 0.0
    %1452 = vmatprep.subr.mxu0 0.0
    %1453 = vmatpush1.xpose.msra.mxu0 0.0
    %1454 = vmatprep.subr.mxu0 0.0
    %1455 = vmatpush1.xpose.msra.mxu0 0.0
    %1456 = vmatprep.subr.mxu0 0.0
    %1457 = vmatpush1.xpose.msra.mxu0 0.0
    %1458 = vmatprep.subr.mxu0 0.0
    %1459 = vmatpush1.xpose.msra.mxu0 0.0
    %1460 = vmatprep.subr.mxu0 0.0
    %1461 = vmatpush1.xpose.msra.mxu0 0.0
    %1462 = vmatprep.subr.mxu0 0.0
    %1463 = vmatpush1.xpose.msra.mxu0 0.0
    %1464 = vmatprep.subr.mxu0 0.0
    %1465 = vmatpush1.xpose.msra.mxu0 0.0
    %1466 = vmatprep.subr.mxu0 0.0
    %1467 = vmatpush1.xpose.msra.mxu0 0.0
    %1468 = vmatprep.subr.mxu0 0.0
    %1469 = vmatpush1.xpose.msra.mxu0 0.0
    %1470 = vmatprep.subr.mxu0 0.0
    %1471 = vmatpush1.xpose.msra.mxu0 0.0
    %1472 = vmatprep.subr.mxu0 0.0
    %1473 = vmatpush1.xpose.msra.mxu0 0.0
    %1474 = vmatprep.subr.mxu0 0.0
    %1475 = vmatpush1.xpose.msra.mxu0 0.0
    %1476 = vmatprep.subr.mxu0 0.0
    %1477 = vmatpush1.xpose.msra.mxu0 0.0
    %1478 = vmatprep.subr.mxu0 0.0
    %1479 = vmatpush1.xpose.msra.mxu0 0.0
    %1480 = vmatprep.subr.mxu0 0.0
    %1481 = vmatpush1.xpose.msra.mxu0 0.0
    %1482 = vmatprep.subr.mxu0 0.0
    %1483 = vmatpush1.xpose.msra.mxu0 0.0
    %1484 = vmatprep.subr.mxu0 0.0
    %1485 = vmatpush1.xpose.msra.mxu0 0.0
    %1486 = vmatprep.subr.mxu0 0.0
    %1487 = vmatpush1.xpose.msra.mxu0 0.0
    %1488 = vmatprep.subr.mxu0 0.0
    %1489 = vmatpush1.xpose.msra.mxu0 0.0
    %1490 = vmatprep.subr.mxu0 0.0
    %1491 = vmatpush1.xpose.msra.mxu0 0.0
    %1492 = vmatprep.subr.mxu0 0.0
    %1493 = vmatpush1.xpose.msra.mxu0 0.0
    %1494 = vmatprep.subr.mxu0 0.0
    %1495 = vmatpush1.xpose.msra.mxu0 0.0
    %1496 = vmatprep.subr.mxu0 0.0
    %1497 = vmatpush1.xpose.msra.mxu0 0.0
    %1498 = vmatprep.subr.mxu0 0.0
    %1499 = vmatpush1.xpose.msra.mxu0 0.0
    %1500 = vmatprep.subr.mxu0 0.0
    %1501 = vmatpush1.xpose.msra.mxu0 0.0
    %1502 = vmatprep.subr.mxu0 0.0
    %1503 = vmatpush1.xpose.msra.mxu0 0.0
    %1504 = vmatprep.subr.mxu0 0.0
    %1505 = vmatpush1.xpose.msra.mxu0 0.0
    %1506 = vmatprep.subr.mxu0 0.0
    %1507 = vmatpush1.xpose.msra.mxu0 0.0
    %1508 = vmatprep.mubr.f32.mxu0 0.0
    %1509 = vmatmul.mubr.f32.gmra.mrb[0].mxu0 %v1436
    %v1510 = vpop.f32.mrb[0].mxu0
    %v1511 = vadd.f32 0.0, %v1510
    %v1512 = vpop.f32.mrb[0].mxu0
    %1513 = vdwg.mxu0
    %v1514 = vmul.f32 %v1511, 2.0
    %v1516 = vlaneseq
    %v1517 = vshrl.u32 %v1516, 7
    %v1518 = vsub.s32 0, %v1517
    %v1519 = vrot.slane %v1514, %v1518
    %1521 = vbcast.lane.b32.xlu0 %v1519, 256
    %v1522 = vpop.permute.xlu0 %1521
    %s1524 = sor.u32 256, 8
    %1525 = vbcast.lane.b32.xlu0 %v1519, %s1524
    %v1526 = vpop.permute.xlu0 %1525
    %v1527 = vlaneseq
    %v1528 = vshrl.u32 %v1527, 7
    %v1529 = vsub.s32 1, %v1528
    %v1530 = vrot.slane %v1514, %v1529
    %1532 = vbcast.lane.b32.xlu0 %v1530, 256
    %v1533 = vpop.permute.xlu0 %1532
    %s1535 = sor.u32 256, 8
    %1536 = vbcast.lane.b32.xlu0 %v1530, %s1535
    %v1537 = vpop.permute.xlu0 %1536
    %v1538 = vlaneseq
    %v1539 = vshrl.u32 %v1538, 7
    %v1540 = vsub.s32 2, %v1539
    %v1541 = vrot.slane %v1514, %v1540
    %1543 = vbcast.lane.b32.xlu0 %v1541, 256
    %v1544 = vpop.permute.xlu0 %1543
    %s1546 = sor.u32 256, 8
    %1547 = vbcast.lane.b32.xlu0 %v1541, %s1546
    %v1548 = vpop.permute.xlu0 %1547
    %v1549 = vlaneseq
    %v1550 = vshrl.u32 %v1549, 7
    %v1551 = vsub.s32 3, %v1550
    %v1552 = vrot.slane %v1514, %v1551
    %1554 = vbcast.lane.b32.xlu0 %v1552, 256
    %v1555 = vpop.permute.xlu0 %1554
    %s1557 = sor.u32 256, 8
    %1558 = vbcast.lane.b32.xlu0 %v1552, %s1557
    %v1559 = vpop.permute.xlu0 %1558
    %v1560 = vlaneseq
    %v1561 = vshrl.u32 %v1560, 7
    %v1562 = vsub.s32 4, %v1561
    %v1563 = vrot.slane %v1514, %v1562
    %1565 = vbcast.lane.b32.xlu0 %v1563, 256
    %v1566 = vpop.permute.xlu0 %1565
    %s1568 = sor.u32 256, 8
    %1569 = vbcast.lane.b32.xlu0 %v1563, %s1568
    %v1570 = vpop.permute.xlu0 %1569
    %v1571 = vlaneseq
    %v1572 = vshrl.u32 %v1571, 7
    %v1573 = vsub.s32 5, %v1572
    %v1574 = vrot.slane %v1514, %v1573
    %1576 = vbcast.lane.b32.xlu0 %v1574, 256
    %v1577 = vpop.permute.xlu0 %1576
    %s1579 = sor.u32 256, 8
    %1580 = vbcast.lane.b32.xlu0 %v1574, %s1579
    %v1581 = vpop.permute.xlu0 %1580
    %v1582 = vlaneseq
    %v1583 = vshrl.u32 %v1582, 7
    %v1584 = vsub.s32 6, %v1583
    %v1585 = vrot.slane %v1514, %v1584
    %1587 = vbcast.lane.b32.xlu0 %v1585, 256
    %v1588 = vpop.permute.xlu0 %1587
    %s1590 = sor.u32 256, 8
    %1591 = vbcast.lane.b32.xlu0 %v1585, %s1590
    %v1592 = vpop.permute.xlu0 %1591
    %v1593 = vlaneseq
    %v1594 = vshrl.u32 %v1593, 7
    %v1595 = vsub.s32 7, %v1594
    %v1596 = vrot.slane %v1514, %v1595
    %1598 = vbcast.lane.b32.xlu0 %v1596, 256
    %v1599 = vpop.permute.xlu0 %1598
    %s1601 = sor.u32 256, 8
    %1602 = vbcast.lane.b32.xlu0 %v1596, %s1601
    %v1603 = vpop.permute.xlu0 %1602
    %v1620 = vsub.f32 %v81, %v1522
    %v1621 = vsub.f32 %v84, %v1526
    %v1622 = vsub.f32 %v81, %v1533
    %v1623 = vsub.f32 %v84, %v1537
    %v1624 = vsub.f32 %v81, %v1544
    %v1625 = vsub.f32 %v84, %v1548
    %v1626 = vsub.f32 %v81, %v1555
    %v1627 = vsub.f32 %v84, %v1559
    %v1628 = vsub.f32 %v81, %v1566
    %v1629 = vsub.f32 %v84, %v1570
    %v1630 = vsub.f32 %v81, %v1577
    %v1631 = vsub.f32 %v84, %v1581
    %v1632 = vsub.f32 %v81, %v1588
    %v1633 = vsub.f32 %v84, %v1592
    %v1634 = vsub.f32 %v81, %v1599
    %v1635 = vsub.f32 %v84, %v1603
    %1652 = vset.pattern.permute.xlu0 0
    %1653 = vperm.xlu0 %1652, %v1620
    %v1654 = vpop.permute.xlu0 %1653
    %1655 = vset.pattern.permute.xlu0 0
    %1656 = vperm.xlu0 %1655, %v1621
    %v1657 = vpop.permute.xlu0 %1656
    %1658 = vset.pattern.permute.xlu0 0
    %1659 = vperm.xlu0 %1658, %v1622
    %v1660 = vpop.permute.xlu0 %1659
    %1661 = vset.pattern.permute.xlu0 0
    %1662 = vperm.xlu0 %1661, %v1623
    %v1663 = vpop.permute.xlu0 %1662
    %1664 = vset.pattern.permute.xlu0 0
    %1665 = vperm.xlu0 %1664, %v1624
    %v1666 = vpop.permute.xlu0 %1665
    %1667 = vset.pattern.permute.xlu0 0
    %1668 = vperm.xlu0 %1667, %v1625
    %v1669 = vpop.permute.xlu0 %1668
    %1670 = vset.pattern.permute.xlu0 0
    %1671 = vperm.xlu0 %1670, %v1626
    %v1672 = vpop.permute.xlu0 %1671
    %1673 = vset.pattern.permute.xlu0 0
    %1674 = vperm.xlu0 %1673, %v1627
    %v1675 = vpop.permute.xlu0 %1674
    %1676 = vset.pattern.permute.xlu0 0
    %1677 = vperm.xlu0 %1676, %v1628
    %v1678 = vpop.permute.xlu0 %1677
    %1679 = vset.pattern.permute.xlu0 0
    %1680 = vperm.xlu0 %1679, %v1629
    %v1681 = vpop.permute.xlu0 %1680
    %1682 = vset.pattern.permute.xlu0 0
    %1683 = vperm.xlu0 %1682, %v1630
    %v1684 = vpop.permute.xlu0 %1683
    %1685 = vset.pattern.permute.xlu0 0
    %1686 = vperm.xlu0 %1685, %v1631
    %v1687 = vpop.permute.xlu0 %1686
    %1688 = vset.pattern.permute.xlu0 0
    %1689 = vperm.xlu0 %1688, %v1632
    %v1690 = vpop.permute.xlu0 %1689
    %1691 = vset.pattern.permute.xlu0 0
    %1692 = vperm.xlu0 %1691, %v1633
    %v1693 = vpop.permute.xlu0 %1692
    %1694 = vset.pattern.permute.xlu0 0
    %1695 = vperm.xlu0 %1694, %v1634
    %v1696 = vpop.permute.xlu0 %1695
    %1697 = vset.pattern.permute.xlu0 0
    %1698 = vperm.xlu0 %1697, %v1635
    %v1699 = vpop.permute.xlu0 %1698
    %v1700 = vlaneseq
    %v1701 = vshrl.u32 %v1700, 7
    %v1702 = vsub.s32 %v92, %v1701
    %v1703 = vrot.slane %v1654, %v1702
    %v1704 = vlaneseq
    %v1705 = vshrl.u32 %v1704, 7
    %v1706 = vsub.s32 %v390, %v1705
    %v1707 = vrot.slane %v1657, %v1706
    %v1708 = vsel %vm395, %v1707, %v1703
    %v1709 = vlaneseq
    %v1710 = vshrl.u32 %v1709, 7
    %v1711 = vsub.s32 %v92, %v1710
    %v1712 = vrot.slane %v1660, %v1711
    %v1713 = vlaneseq
    %v1714 = vshrl.u32 %v1713, 7
    %v1715 = vsub.s32 %v390, %v1714
    %v1716 = vrot.slane %v1663, %v1715
    %v1717 = vsel %vm395, %v1716, %v1712
    %v1718 = vlaneseq
    %v1719 = vshrl.u32 %v1718, 7
    %v1720 = vsub.s32 %v92, %v1719
    %v1721 = vrot.slane %v1666, %v1720
    %v1722 = vlaneseq
    %v1723 = vshrl.u32 %v1722, 7
    %v1724 = vsub.s32 %v390, %v1723
    %v1725 = vrot.slane %v1669, %v1724
    %v1726 = vsel %vm395, %v1725, %v1721
    %v1727 = vlaneseq
    %v1728 = vshrl.u32 %v1727, 7
    %v1729 = vsub.s32 %v92, %v1728
    %v1730 = vrot.slane %v1672, %v1729
    %v1731 = vlaneseq
    %v1732 = vshrl.u32 %v1731, 7
    %v1733 = vsub.s32 %v390, %v1732
    %v1734 = vrot.slane %v1675, %v1733
    %v1735 = vsel %vm395, %v1734, %v1730
    %v1736 = vlaneseq
    %v1737 = vshrl.u32 %v1736, 7
    %v1738 = vsub.s32 %v92, %v1737
    %v1739 = vrot.slane %v1678, %v1738
    %v1740 = vlaneseq
    %v1741 = vshrl.u32 %v1740, 7
    %v1742 = vsub.s32 %v390, %v1741
    %v1743 = vrot.slane %v1681, %v1742
    %v1744 = vsel %vm395, %v1743, %v1739
    %v1745 = vlaneseq
    %v1746 = vshrl.u32 %v1745, 7
    %v1747 = vsub.s32 %v92, %v1746
    %v1748 = vrot.slane %v1684, %v1747
    %v1749 = vlaneseq
    %v1750 = vshrl.u32 %v1749, 7
    %v1751 = vsub.s32 %v390, %v1750
    %v1752 = vrot.slane %v1687, %v1751
    %v1753 = vsel %vm395, %v1752, %v1748
    %v1754 = vlaneseq
    %v1755 = vshrl.u32 %v1754, 7
    %v1756 = vsub.s32 %v92, %v1755
    %v1757 = vrot.slane %v1690, %v1756
    %v1758 = vlaneseq
    %v1759 = vshrl.u32 %v1758, 7
    %v1760 = vsub.s32 %v390, %v1759
    %v1761 = vrot.slane %v1693, %v1760
    %v1762 = vsel %vm395, %v1761, %v1757
    %v1763 = vlaneseq
    %v1764 = vshrl.u32 %v1763, 7
    %v1765 = vsub.s32 %v92, %v1764
    %v1766 = vrot.slane %v1696, %v1765
    %v1767 = vlaneseq
    %v1768 = vshrl.u32 %v1767, 7
    %v1769 = vsub.s32 %v390, %v1768
    %v1770 = vrot.slane %v1699, %v1769
    %v1771 = vsel %vm395, %v1770, %v1766
    %v1772 = vsel %vm102, %v1717, %v1708
    %v1773 = vsel %vm105, %v1726, %v1772
    %v1774 = vsel %vm108, %v1735, %v1773
    %v1775 = vsel %vm111, %v1744, %v1774
    %v1776 = vsel %vm114, %v1753, %v1775
    %v1777 = vsel %vm117, %v1762, %v1776
    %v1778 = vsel %vm120, %v1771, %v1777
    %v1780 = vsel %vm468, %v1778, inf
    %1781 = vmin.xlane.f32.xlu0 %v1780
    %v1782 = vpop.xlane.xlu0 %1781
    %v1784 = vlaneseq
    %v1785 = vshrl.u32 %v1784, 7
    %v1786 = vsub.s32 0, %v1785
    %v1787 = vrot.slane %v1782, %v1786
    %v1788 = vlaneseq
    %v1789 = vshrl.u32 %v1788, 7
    %v1790 = vsub.s32 1, %v1789
    %v1791 = vrot.slane %v1782, %v1790
    %v1792 = vlaneseq
    %v1793 = vshrl.u32 %v1792, 7
    %v1794 = vsub.s32 2, %v1793
    %v1795 = vrot.slane %v1782, %v1794
    %v1796 = vlaneseq
    %v1797 = vshrl.u32 %v1796, 7
    %v1798 = vsub.s32 3, %v1797
    %v1799 = vrot.slane %v1782, %v1798
    %v1800 = vlaneseq
    %v1801 = vshrl.u32 %v1800, 7
    %v1802 = vsub.s32 4, %v1801
    %v1803 = vrot.slane %v1782, %v1802
    %v1804 = vlaneseq
    %v1805 = vshrl.u32 %v1804, 7
    %v1806 = vsub.s32 5, %v1805
    %v1807 = vrot.slane %v1782, %v1806
    %v1808 = vlaneseq
    %v1809 = vshrl.u32 %v1808, 7
    %v1810 = vsub.s32 6, %v1809
    %v1811 = vrot.slane %v1782, %v1810
    %v1812 = vlaneseq
    %v1813 = vshrl.u32 %v1812, 7
    %v1814 = vsub.s32 7, %v1813
    %v1815 = vrot.slane %v1782, %v1814
    %vm1824 = vcmp.le.f32.partialorder %v1620, %v1787
    %vm1825 = vcmp.le.f32.partialorder %v1621, %v1787
    %vm1826 = vcmp.le.f32.partialorder %v1622, %v1791
    %vm1827 = vcmp.le.f32.partialorder %v1623, %v1791
    %vm1828 = vcmp.le.f32.partialorder %v1624, %v1795
    %vm1829 = vcmp.le.f32.partialorder %v1625, %v1795
    %vm1830 = vcmp.le.f32.partialorder %v1626, %v1799
    %vm1831 = vcmp.le.f32.partialorder %v1627, %v1799
    %vm1832 = vcmp.le.f32.partialorder %v1628, %v1803
    %vm1833 = vcmp.le.f32.partialorder %v1629, %v1803
    %vm1834 = vcmp.le.f32.partialorder %v1630, %v1807
    %vm1835 = vcmp.le.f32.partialorder %v1631, %v1807
    %vm1836 = vcmp.le.f32.partialorder %v1632, %v1811
    %vm1837 = vcmp.le.f32.partialorder %v1633, %v1811
    %vm1838 = vcmp.le.f32.partialorder %v1634, %v1815
    %vm1839 = vcmp.le.f32.partialorder %v1635, %v1815
    %v1840 = vsel %vm1824, %v531, 16
    %v1841 = vsel %vm1825, %v535, 16
    %v1842 = vsel %vm1826, %v531, 16
    %v1843 = vsel %vm1827, %v535, 16
    %v1844 = vsel %vm1828, %v531, 16
    %v1845 = vsel %vm1829, %v535, 16
    %v1846 = vsel %vm1830, %v531, 16
    %v1847 = vsel %vm1831, %v535, 16
    %v1848 = vsel %vm1832, %v531, 16
    %v1849 = vsel %vm1833, %v535, 16
    %v1850 = vsel %vm1834, %v531, 16
    %v1851 = vsel %vm1835, %v535, 16
    %v1852 = vsel %vm1836, %v531, 16
    %v1853 = vsel %vm1837, %v535, 16
    %v1854 = vsel %vm1838, %v531, 16
    %v1855 = vsel %vm1839, %v535, 16
    %1856 = vset.pattern.permute.xlu0 0
    %1857 = vperm.xlu0 %1856, %v1840
    %v1858 = vpop.permute.xlu0 %1857
    %1859 = vset.pattern.permute.xlu0 0
    %1860 = vperm.xlu0 %1859, %v1841
    %v1861 = vpop.permute.xlu0 %1860
    %1862 = vset.pattern.permute.xlu0 0
    %1863 = vperm.xlu0 %1862, %v1842
    %v1864 = vpop.permute.xlu0 %1863
    %1865 = vset.pattern.permute.xlu0 0
    %1866 = vperm.xlu0 %1865, %v1843
    %v1867 = vpop.permute.xlu0 %1866
    %1868 = vset.pattern.permute.xlu0 0
    %1869 = vperm.xlu0 %1868, %v1844
    %v1870 = vpop.permute.xlu0 %1869
    %1871 = vset.pattern.permute.xlu0 0
    %1872 = vperm.xlu0 %1871, %v1845
    %v1873 = vpop.permute.xlu0 %1872
    %1874 = vset.pattern.permute.xlu0 0
    %1875 = vperm.xlu0 %1874, %v1846
    %v1876 = vpop.permute.xlu0 %1875
    %1877 = vset.pattern.permute.xlu0 0
    %1878 = vperm.xlu0 %1877, %v1847
    %v1879 = vpop.permute.xlu0 %1878
    %1880 = vset.pattern.permute.xlu0 0
    %1881 = vperm.xlu0 %1880, %v1848
    %v1882 = vpop.permute.xlu0 %1881
    %1883 = vset.pattern.permute.xlu0 0
    %1884 = vperm.xlu0 %1883, %v1849
    %v1885 = vpop.permute.xlu0 %1884
    %1886 = vset.pattern.permute.xlu0 0
    %1887 = vperm.xlu0 %1886, %v1850
    %v1888 = vpop.permute.xlu0 %1887
    %1889 = vset.pattern.permute.xlu0 0
    %1890 = vperm.xlu0 %1889, %v1851
    %v1891 = vpop.permute.xlu0 %1890
    %1892 = vset.pattern.permute.xlu0 0
    %1893 = vperm.xlu0 %1892, %v1852
    %v1894 = vpop.permute.xlu0 %1893
    %1895 = vset.pattern.permute.xlu0 0
    %1896 = vperm.xlu0 %1895, %v1853
    %v1897 = vpop.permute.xlu0 %1896
    %1898 = vset.pattern.permute.xlu0 0
    %1899 = vperm.xlu0 %1898, %v1854
    %v1900 = vpop.permute.xlu0 %1899
    %1901 = vset.pattern.permute.xlu0 0
    %1902 = vperm.xlu0 %1901, %v1855
    %v1903 = vpop.permute.xlu0 %1902
    %v1904 = vlaneseq
    %v1905 = vshrl.u32 %v1904, 7
    %v1906 = vsub.s32 %v92, %v1905
    %v1907 = vrot.slane %v1858, %v1906
    %v1908 = vlaneseq
    %v1909 = vshrl.u32 %v1908, 7
    %v1910 = vsub.s32 %v390, %v1909
    %v1911 = vrot.slane %v1861, %v1910
    %v1912 = vsel %vm395, %v1911, %v1907
    %v1913 = vlaneseq
    %v1914 = vshrl.u32 %v1913, 7
    %v1915 = vsub.s32 %v92, %v1914
    %v1916 = vrot.slane %v1864, %v1915
    %v1917 = vlaneseq
    %v1918 = vshrl.u32 %v1917, 7
    %v1919 = vsub.s32 %v390, %v1918
    %v1920 = vrot.slane %v1867, %v1919
    %v1921 = vsel %vm395, %v1920, %v1916
    %v1922 = vlaneseq
    %v1923 = vshrl.u32 %v1922, 7
    %v1924 = vsub.s32 %v92, %v1923
    %v1925 = vrot.slane %v1870, %v1924
    %v1926 = vlaneseq
    %v1927 = vshrl.u32 %v1926, 7
    %v1928 = vsub.s32 %v390, %v1927
    %v1929 = vrot.slane %v1873, %v1928
    %v1930 = vsel %vm395, %v1929, %v1925
    %v1931 = vlaneseq
    %v1932 = vshrl.u32 %v1931, 7
    %v1933 = vsub.s32 %v92, %v1932
    %v1934 = vrot.slane %v1876, %v1933
    %v1935 = vlaneseq
    %v1936 = vshrl.u32 %v1935, 7
    %v1937 = vsub.s32 %v390, %v1936
    %v1938 = vrot.slane %v1879, %v1937
    %v1939 = vsel %vm395, %v1938, %v1934
    %v1940 = vlaneseq
    %v1941 = vshrl.u32 %v1940, 7
    %v1942 = vsub.s32 %v92, %v1941
    %v1943 = vrot.slane %v1882, %v1942
    %v1944 = vlaneseq
    %v1945 = vshrl.u32 %v1944, 7
    %v1946 = vsub.s32 %v390, %v1945
    %v1947 = vrot.slane %v1885, %v1946
    %v1948 = vsel %vm395, %v1947, %v1943
    %v1949 = vlaneseq
    %v1950 = vshrl.u32 %v1949, 7
    %v1951 = vsub.s32 %v92, %v1950
    %v1952 = vrot.slane %v1888, %v1951
    %v1953 = vlaneseq
    %v1954 = vshrl.u32 %v1953, 7
    %v1955 = vsub.s32 %v390, %v1954
    %v1956 = vrot.slane %v1891, %v1955
    %v1957 = vsel %vm395, %v1956, %v1952
    %v1958 = vlaneseq
    %v1959 = vshrl.u32 %v1958, 7
    %v1960 = vsub.s32 %v92, %v1959
    %v1961 = vrot.slane %v1894, %v1960
    %v1962 = vlaneseq
    %v1963 = vshrl.u32 %v1962, 7
    %v1964 = vsub.s32 %v390, %v1963
    %v1965 = vrot.slane %v1897, %v1964
    %v1966 = vsel %vm395, %v1965, %v1961
    %v1967 = vlaneseq
    %v1968 = vshrl.u32 %v1967, 7
    %v1969 = vsub.s32 %v92, %v1968
    %v1970 = vrot.slane %v1900, %v1969
    %v1971 = vlaneseq
    %v1972 = vshrl.u32 %v1971, 7
    %v1973 = vsub.s32 %v390, %v1972
    %v1974 = vrot.slane %v1903, %v1973
    %v1975 = vsel %vm395, %v1974, %v1970
    %v1976 = vsel %vm102, %v1921, %v1912
    %v1977 = vsel %vm105, %v1930, %v1976
    %v1978 = vsel %vm108, %v1939, %v1977
    %v1979 = vsel %vm111, %v1948, %v1978
    %v1980 = vsel %vm114, %v1957, %v1979
    %v1981 = vsel %vm117, %v1966, %v1980
    %v1982 = vsel %vm120, %v1975, %v1981
    %v1983 = vsel %vm468, %v1982, 2147483647
    %v1984 = vand.u32 %v1983, 65535
    %v1985 = vshra.s32 %v1983, 16
    %v1986 = vcvt.s32.f32 %v1984
    %v1987 = vcvt.s32.f32 %v1985
    %1988 = vmin.xlane.f32.xlu0 %v1987
    %v1989 = vpop.xlane.xlu0 %1988
    %vm1990 = vcmp.eq.f32.partialorder %v1987, %v1989
    %v1991 = vsel %vm1990, %v1986, inf
    %1992 = vmin.xlane.f32.xlu0 %v1991
    %v1993 = vpop.xlane.xlu0 %1992
    %v1994 = vcvt.f32.s32 %v1993
    %v1995 = vcvt.f32.s32 %v1989
    %v1996 = vshll.u32 %v1995, 16
    %v1997 = vadd.s32 %v1996, %v1994
    %vm1998 = vcmp.eq.s32.totalorder %v92, %v1997
    %v1999 = vsel %vm1998, 1, 0
    %v2000 = vcvt.s32.f32 %v1999
    %v2002 = vsel %vm468, %v2000, 0
    %2004 = vmatprep.subr.mxu0 0.0
    %2005 = vmatpush1.msra.mxu0 %v54
    %2006 = vmatprep.subr.mxu0 0.0
    %2007 = vmatpush1.msra.mxu0 %v55
    %2008 = vmatprep.subr.mxu0 0.0
    %2009 = vmatpush1.msra.mxu0 0.0
    %2010 = vmatprep.subr.mxu0 0.0
    %2011 = vmatpush1.msra.mxu0 0.0
    %2012 = vmatprep.subr.mxu0 0.0
    %2013 = vmatpush1.msra.mxu0 0.0
    %2014 = vmatprep.subr.mxu0 0.0
    %2015 = vmatpush1.msra.mxu0 0.0
    %2016 = vmatprep.subr.mxu0 0.0
    %2017 = vmatpush1.msra.mxu0 0.0
    %2018 = vmatprep.subr.mxu0 0.0
    %2019 = vmatpush1.msra.mxu0 0.0
    %2020 = vmatprep.subr.mxu0 0.0
    %2021 = vmatpush1.msra.mxu0 0.0
    %2022 = vmatprep.subr.mxu0 0.0
    %2023 = vmatpush1.msra.mxu0 0.0
    %2024 = vmatprep.subr.mxu0 0.0
    %2025 = vmatpush1.msra.mxu0 0.0
    %2026 = vmatprep.subr.mxu0 0.0
    %2027 = vmatpush1.msra.mxu0 0.0
    %2028 = vmatprep.subr.mxu0 0.0
    %2029 = vmatpush1.msra.mxu0 0.0
    %2030 = vmatprep.subr.mxu0 0.0
    %2031 = vmatpush1.msra.mxu0 0.0
    %2032 = vmatprep.subr.mxu0 0.0
    %2033 = vmatpush1.msra.mxu0 0.0
    %2034 = vmatprep.subr.mxu0 0.0
    %2035 = vmatpush1.msra.mxu0 0.0
    %2036 = vmatprep.subr.mxu0 0.0
    %2037 = vmatpush1.msra.mxu0 0.0
    %2038 = vmatprep.subr.mxu0 0.0
    %2039 = vmatpush1.msra.mxu0 0.0
    %2040 = vmatprep.subr.mxu0 0.0
    %2041 = vmatpush1.msra.mxu0 0.0
    %2042 = vmatprep.subr.mxu0 0.0
    %2043 = vmatpush1.msra.mxu0 0.0
    %2044 = vmatprep.subr.mxu0 0.0
    %2045 = vmatpush1.msra.mxu0 0.0
    %2046 = vmatprep.subr.mxu0 0.0
    %2047 = vmatpush1.msra.mxu0 0.0
    %2048 = vmatprep.subr.mxu0 0.0
    %2049 = vmatpush1.msra.mxu0 0.0
    %2050 = vmatprep.subr.mxu0 0.0
    %2051 = vmatpush1.msra.mxu0 0.0
    %2052 = vmatprep.subr.mxu0 0.0
    %2053 = vmatpush1.msra.mxu0 0.0
    %2054 = vmatprep.subr.mxu0 0.0
    %2055 = vmatpush1.msra.mxu0 0.0
    %2056 = vmatprep.subr.mxu0 0.0
    %2057 = vmatpush1.msra.mxu0 0.0
    %2058 = vmatprep.subr.mxu0 0.0
    %2059 = vmatpush1.msra.mxu0 0.0
    %2060 = vmatprep.subr.mxu0 0.0
    %2061 = vmatpush1.msra.mxu0 0.0
    %2062 = vmatprep.subr.mxu0 0.0
    %2063 = vmatpush1.msra.mxu0 0.0
    %2064 = vmatprep.subr.mxu0 0.0
    %2065 = vmatpush1.msra.mxu0 0.0
    %2066 = vmatprep.subr.mxu0 0.0
    %2067 = vmatpush1.msra.mxu0 0.0
    %2068 = vmatprep.mubr.f32.mxu0 0.0
    %2069 = vmatmul.mubr.f32.gmra.mrb[0].mxu0 %v2002
    %v2070 = vpop.f32.mrb[0].mxu0
    %v2071 = vadd.f32 0.0, %v2070
    %v2072 = vpop.f32.mrb[0].mxu0
    %2073 = vdwg.mxu0
    %v2074 = vrot.slane %v42, 3
    %v2075 = vrot.slane %v43, 2
    %v2076 = vsel %vm102, %v2075, %v2074
    %v2077 = vrot.slane %v44, 1
    %v2078 = vsel %vm105, %v2077, %v2076
    %v2079 = vsel %vm108, %v45, %v2078
    %v2080 = vrot.slane %v46, 7
    %v2081 = vsel %vm111, %v2080, %v2079
    %v2082 = vrot.slane %v47, 6
    %v2083 = vsel %vm114, %v2082, %v2081
    %v2084 = vrot.slane %v48, 5
    %v2085 = vsel %vm117, %v2084, %v2083
    %v2086 = vrot.slane %v49, 4
    %v2087 = vsel %vm120, %v2086, %v2085
    %v2088 = vsel %vm66, %v2087, 0
    %v2091 = vsel %vm66, %v56, 0
    %v2094 = vsel %vm66, %v57, 0
    %2096 = vmatprep.subr.mxu0 0.0
    %2097 = vmatpush1.xpose.msra.mxu0 %v2091
    %2098 = vmatprep.subr.mxu0 0.0
    %2099 = vmatpush1.xpose.msra.mxu0 %v2094
    %2100 = vmatprep.subr.mxu0 0.0
    %2101 = vmatpush1.xpose.msra.mxu0 0.0
    %2102 = vmatprep.subr.mxu0 0.0
    %2103 = vmatpush1.xpose.msra.mxu0 0.0
    %2104 = vmatprep.subr.mxu0 0.0
    %2105 = vmatpush1.xpose.msra.mxu0 0.0
    %2106 = vmatprep.subr.mxu0 0.0
    %2107 = vmatpush1.xpose.msra.mxu0 0.0
    %2108 = vmatprep.subr.mxu0 0.0
    %2109 = vmatpush1.xpose.msra.mxu0 0.0
    %2110 = vmatprep.subr.mxu0 0.0
    %2111 = vmatpush1.xpose.msra.mxu0 0.0
    %2112 = vmatprep.subr.mxu0 0.0
    %2113 = vmatpush1.xpose.msra.mxu0 0.0
    %2114 = vmatprep.subr.mxu0 0.0
    %2115 = vmatpush1.xpose.msra.mxu0 0.0
    %2116 = vmatprep.subr.mxu0 0.0
    %2117 = vmatpush1.xpose.msra.mxu0 0.0
    %2118 = vmatprep.subr.mxu0 0.0
    %2119 = vmatpush1.xpose.msra.mxu0 0.0
    %2120 = vmatprep.subr.mxu0 0.0
    %2121 = vmatpush1.xpose.msra.mxu0 0.0
    %2122 = vmatprep.subr.mxu0 0.0
    %2123 = vmatpush1.xpose.msra.mxu0 0.0
    %2124 = vmatprep.subr.mxu0 0.0
    %2125 = vmatpush1.xpose.msra.mxu0 0.0
    %2126 = vmatprep.subr.mxu0 0.0
    %2127 = vmatpush1.xpose.msra.mxu0 0.0
    %2128 = vmatprep.subr.mxu0 0.0
    %2129 = vmatpush1.xpose.msra.mxu0 0.0
    %2130 = vmatprep.subr.mxu0 0.0
    %2131 = vmatpush1.xpose.msra.mxu0 0.0
    %2132 = vmatprep.subr.mxu0 0.0
    %2133 = vmatpush1.xpose.msra.mxu0 0.0
    %2134 = vmatprep.subr.mxu0 0.0
    %2135 = vmatpush1.xpose.msra.mxu0 0.0
    %2136 = vmatprep.subr.mxu0 0.0
    %2137 = vmatpush1.xpose.msra.mxu0 0.0
    %2138 = vmatprep.subr.mxu0 0.0
    %2139 = vmatpush1.xpose.msra.mxu0 0.0
    %2140 = vmatprep.subr.mxu0 0.0
    %2141 = vmatpush1.xpose.msra.mxu0 0.0
    %2142 = vmatprep.subr.mxu0 0.0
    %2143 = vmatpush1.xpose.msra.mxu0 0.0
    %2144 = vmatprep.subr.mxu0 0.0
    %2145 = vmatpush1.xpose.msra.mxu0 0.0
    %2146 = vmatprep.subr.mxu0 0.0
    %2147 = vmatpush1.xpose.msra.mxu0 0.0
    %2148 = vmatprep.subr.mxu0 0.0
    %2149 = vmatpush1.xpose.msra.mxu0 0.0
    %2150 = vmatprep.subr.mxu0 0.0
    %2151 = vmatpush1.xpose.msra.mxu0 0.0
    %2152 = vmatprep.subr.mxu0 0.0
    %2153 = vmatpush1.xpose.msra.mxu0 0.0
    %2154 = vmatprep.subr.mxu0 0.0
    %2155 = vmatpush1.xpose.msra.mxu0 0.0
    %2156 = vmatprep.subr.mxu0 0.0
    %2157 = vmatpush1.xpose.msra.mxu0 0.0
    %2158 = vmatprep.subr.mxu0 0.0
    %2159 = vmatpush1.xpose.msra.mxu0 0.0
    %2160 = vmatprep.mubr.f32.mxu0 0.0
    %2161 = vmatmul.mubr.f32.gmra.mrb[0].mxu0 %v2088
    %v2162 = vpop.f32.mrb[0].mxu0
    %v2163 = vadd.f32 0.0, %v2162
    %v2164 = vpop.f32.mrb[0].mxu0
    %2165 = vdwg.mxu0
    %v2166 = vmul.f32 %v2163, 2.0
    %v2168 = vlaneseq
    %v2169 = vshrl.u32 %v2168, 7
    %v2170 = vsub.s32 0, %v2169
    %v2171 = vrot.slane %v2166, %v2170
    %2173 = vbcast.lane.b32.xlu0 %v2171, 256
    %v2174 = vpop.permute.xlu0 %2173
    %s2176 = sor.u32 256, 8
    %2177 = vbcast.lane.b32.xlu0 %v2171, %s2176
    %v2178 = vpop.permute.xlu0 %2177
    %v2179 = vlaneseq
    %v2180 = vshrl.u32 %v2179, 7
    %v2181 = vsub.s32 1, %v2180
    %v2182 = vrot.slane %v2166, %v2181
    %2184 = vbcast.lane.b32.xlu0 %v2182, 256
    %v2185 = vpop.permute.xlu0 %2184
    %s2187 = sor.u32 256, 8
    %2188 = vbcast.lane.b32.xlu0 %v2182, %s2187
    %v2189 = vpop.permute.xlu0 %2188
    %v2190 = vlaneseq
    %v2191 = vshrl.u32 %v2190, 7
    %v2192 = vsub.s32 2, %v2191
    %v2193 = vrot.slane %v2166, %v2192
    %2195 = vbcast.lane.b32.xlu0 %v2193, 256
    %v2196 = vpop.permute.xlu0 %2195
    %s2198 = sor.u32 256, 8
    %2199 = vbcast.lane.b32.xlu0 %v2193, %s2198
    %v2200 = vpop.permute.xlu0 %2199
    %v2201 = vlaneseq
    %v2202 = vshrl.u32 %v2201, 7
    %v2203 = vsub.s32 3, %v2202
    %v2204 = vrot.slane %v2166, %v2203
    %2206 = vbcast.lane.b32.xlu0 %v2204, 256
    %v2207 = vpop.permute.xlu0 %2206
    %s2209 = sor.u32 256, 8
    %2210 = vbcast.lane.b32.xlu0 %v2204, %s2209
    %v2211 = vpop.permute.xlu0 %2210
    %v2212 = vlaneseq
    %v2213 = vshrl.u32 %v2212, 7
    %v2214 = vsub.s32 4, %v2213
    %v2215 = vrot.slane %v2166, %v2214
    %2217 = vbcast.lane.b32.xlu0 %v2215, 256
    %v2218 = vpop.permute.xlu0 %2217
    %s2220 = sor.u32 256, 8
    %2221 = vbcast.lane.b32.xlu0 %v2215, %s2220
    %v2222 = vpop.permute.xlu0 %2221
    %v2223 = vlaneseq
    %v2224 = vshrl.u32 %v2223, 7
    %v2225 = vsub.s32 5, %v2224
    %v2226 = vrot.slane %v2166, %v2225
    %2228 = vbcast.lane.b32.xlu0 %v2226, 256
    %v2229 = vpop.permute.xlu0 %2228
    %s2231 = sor.u32 256, 8
    %2232 = vbcast.lane.b32.xlu0 %v2226, %s2231
    %v2233 = vpop.permute.xlu0 %2232
    %v2234 = vlaneseq
    %v2235 = vshrl.u32 %v2234, 7
    %v2236 = vsub.s32 6, %v2235
    %v2237 = vrot.slane %v2166, %v2236
    %2239 = vbcast.lane.b32.xlu0 %v2237, 256
    %v2240 = vpop.permute.xlu0 %2239
    %s2242 = sor.u32 256, 8
    %2243 = vbcast.lane.b32.xlu0 %v2237, %s2242
    %v2244 = vpop.permute.xlu0 %2243
    %v2245 = vlaneseq
    %v2246 = vshrl.u32 %v2245, 7
    %v2247 = vsub.s32 7, %v2246
    %v2248 = vrot.slane %v2166, %v2247
    %2250 = vbcast.lane.b32.xlu0 %v2248, 256
    %v2251 = vpop.permute.xlu0 %2250
    %s2253 = sor.u32 256, 8
    %2254 = vbcast.lane.b32.xlu0 %v2248, %s2253
    %v2255 = vpop.permute.xlu0 %2254
    %v2272 = vsub.f32 %v87, %v2174
    %v2273 = vsub.f32 %v90, %v2178
    %v2274 = vsub.f32 %v87, %v2185
    %v2275 = vsub.f32 %v90, %v2189
    %v2276 = vsub.f32 %v87, %v2196
    %v2277 = vsub.f32 %v90, %v2200
    %v2278 = vsub.f32 %v87, %v2207
    %v2279 = vsub.f32 %v90, %v2211
    %v2280 = vsub.f32 %v87, %v2218
    %v2281 = vsub.f32 %v90, %v2222
    %v2282 = vsub.f32 %v87, %v2229
    %v2283 = vsub.f32 %v90, %v2233
    %v2284 = vsub.f32 %v87, %v2240
    %v2285 = vsub.f32 %v90, %v2244
    %v2286 = vsub.f32 %v87, %v2251
    %v2287 = vsub.f32 %v90, %v2255
    %2304 = vset.pattern.permute.xlu0 0
    %2305 = vperm.xlu0 %2304, %v2272
    %v2306 = vpop.permute.xlu0 %2305
    %2307 = vset.pattern.permute.xlu0 0
    %2308 = vperm.xlu0 %2307, %v2273
    %v2309 = vpop.permute.xlu0 %2308
    %2310 = vset.pattern.permute.xlu0 0
    %2311 = vperm.xlu0 %2310, %v2274
    %v2312 = vpop.permute.xlu0 %2311
    %2313 = vset.pattern.permute.xlu0 0
    %2314 = vperm.xlu0 %2313, %v2275
    %v2315 = vpop.permute.xlu0 %2314
    %2316 = vset.pattern.permute.xlu0 0
    %2317 = vperm.xlu0 %2316, %v2276
    %v2318 = vpop.permute.xlu0 %2317
    %2319 = vset.pattern.permute.xlu0 0
    %2320 = vperm.xlu0 %2319, %v2277
    %v2321 = vpop.permute.xlu0 %2320
    %2322 = vset.pattern.permute.xlu0 0
    %2323 = vperm.xlu0 %2322, %v2278
    %v2324 = vpop.permute.xlu0 %2323
    %2325 = vset.pattern.permute.xlu0 0
    %2326 = vperm.xlu0 %2325, %v2279
    %v2327 = vpop.permute.xlu0 %2326
    %2328 = vset.pattern.permute.xlu0 0
    %2329 = vperm.xlu0 %2328, %v2280
    %v2330 = vpop.permute.xlu0 %2329
    %2331 = vset.pattern.permute.xlu0 0
    %2332 = vperm.xlu0 %2331, %v2281
    %v2333 = vpop.permute.xlu0 %2332
    %2334 = vset.pattern.permute.xlu0 0
    %2335 = vperm.xlu0 %2334, %v2282
    %v2336 = vpop.permute.xlu0 %2335
    %2337 = vset.pattern.permute.xlu0 0
    %2338 = vperm.xlu0 %2337, %v2283
    %v2339 = vpop.permute.xlu0 %2338
    %2340 = vset.pattern.permute.xlu0 0
    %2341 = vperm.xlu0 %2340, %v2284
    %v2342 = vpop.permute.xlu0 %2341
    %2343 = vset.pattern.permute.xlu0 0
    %2344 = vperm.xlu0 %2343, %v2285
    %v2345 = vpop.permute.xlu0 %2344
    %2346 = vset.pattern.permute.xlu0 0
    %2347 = vperm.xlu0 %2346, %v2286
    %v2348 = vpop.permute.xlu0 %2347
    %2349 = vset.pattern.permute.xlu0 0
    %2350 = vperm.xlu0 %2349, %v2287
    %v2351 = vpop.permute.xlu0 %2350
    %v2352 = vlaneseq
    %v2353 = vshrl.u32 %v2352, 7
    %v2354 = vsub.s32 %v92, %v2353
    %v2355 = vrot.slane %v2306, %v2354
    %v2356 = vlaneseq
    %v2357 = vshrl.u32 %v2356, 7
    %v2358 = vsub.s32 %v390, %v2357
    %v2359 = vrot.slane %v2309, %v2358
    %v2360 = vsel %vm395, %v2359, %v2355
    %v2361 = vlaneseq
    %v2362 = vshrl.u32 %v2361, 7
    %v2363 = vsub.s32 %v92, %v2362
    %v2364 = vrot.slane %v2312, %v2363
    %v2365 = vlaneseq
    %v2366 = vshrl.u32 %v2365, 7
    %v2367 = vsub.s32 %v390, %v2366
    %v2368 = vrot.slane %v2315, %v2367
    %v2369 = vsel %vm395, %v2368, %v2364
    %v2370 = vlaneseq
    %v2371 = vshrl.u32 %v2370, 7
    %v2372 = vsub.s32 %v92, %v2371
    %v2373 = vrot.slane %v2318, %v2372
    %v2374 = vlaneseq
    %v2375 = vshrl.u32 %v2374, 7
    %v2376 = vsub.s32 %v390, %v2375
    %v2377 = vrot.slane %v2321, %v2376
    %v2378 = vsel %vm395, %v2377, %v2373
    %v2379 = vlaneseq
    %v2380 = vshrl.u32 %v2379, 7
    %v2381 = vsub.s32 %v92, %v2380
    %v2382 = vrot.slane %v2324, %v2381
    %v2383 = vlaneseq
    %v2384 = vshrl.u32 %v2383, 7
    %v2385 = vsub.s32 %v390, %v2384
    %v2386 = vrot.slane %v2327, %v2385
    %v2387 = vsel %vm395, %v2386, %v2382
    %v2388 = vlaneseq
    %v2389 = vshrl.u32 %v2388, 7
    %v2390 = vsub.s32 %v92, %v2389
    %v2391 = vrot.slane %v2330, %v2390
    %v2392 = vlaneseq
    %v2393 = vshrl.u32 %v2392, 7
    %v2394 = vsub.s32 %v390, %v2393
    %v2395 = vrot.slane %v2333, %v2394
    %v2396 = vsel %vm395, %v2395, %v2391
    %v2397 = vlaneseq
    %v2398 = vshrl.u32 %v2397, 7
    %v2399 = vsub.s32 %v92, %v2398
    %v2400 = vrot.slane %v2336, %v2399
    %v2401 = vlaneseq
    %v2402 = vshrl.u32 %v2401, 7
    %v2403 = vsub.s32 %v390, %v2402
    %v2404 = vrot.slane %v2339, %v2403
    %v2405 = vsel %vm395, %v2404, %v2400
    %v2406 = vlaneseq
    %v2407 = vshrl.u32 %v2406, 7
    %v2408 = vsub.s32 %v92, %v2407
    %v2409 = vrot.slane %v2342, %v2408
    %v2410 = vlaneseq
    %v2411 = vshrl.u32 %v2410, 7
    %v2412 = vsub.s32 %v390, %v2411
    %v2413 = vrot.slane %v2345, %v2412
    %v2414 = vsel %vm395, %v2413, %v2409
    %v2415 = vlaneseq
    %v2416 = vshrl.u32 %v2415, 7
    %v2417 = vsub.s32 %v92, %v2416
    %v2418 = vrot.slane %v2348, %v2417
    %v2419 = vlaneseq
    %v2420 = vshrl.u32 %v2419, 7
    %v2421 = vsub.s32 %v390, %v2420
    %v2422 = vrot.slane %v2351, %v2421
    %v2423 = vsel %vm395, %v2422, %v2418
    %v2424 = vsel %vm102, %v2369, %v2360
    %v2425 = vsel %vm105, %v2378, %v2424
    %v2426 = vsel %vm108, %v2387, %v2425
    %v2427 = vsel %vm111, %v2396, %v2426
    %v2428 = vsel %vm114, %v2405, %v2427
    %v2429 = vsel %vm117, %v2414, %v2428
    %v2430 = vsel %vm120, %v2423, %v2429
    %v2432 = vsel %vm468, %v2430, inf
    %2433 = vmin.xlane.f32.xlu0 %v2432
    %v2434 = vpop.xlane.xlu0 %2433
    %v2436 = vlaneseq
    %v2437 = vshrl.u32 %v2436, 7
    %v2438 = vsub.s32 0, %v2437
    %v2439 = vrot.slane %v2434, %v2438
    %v2440 = vlaneseq
    %v2441 = vshrl.u32 %v2440, 7
    %v2442 = vsub.s32 1, %v2441
    %v2443 = vrot.slane %v2434, %v2442
    %v2444 = vlaneseq
    %v2445 = vshrl.u32 %v2444, 7
    %v2446 = vsub.s32 2, %v2445
    %v2447 = vrot.slane %v2434, %v2446
    %v2448 = vlaneseq
    %v2449 = vshrl.u32 %v2448, 7
    %v2450 = vsub.s32 3, %v2449
    %v2451 = vrot.slane %v2434, %v2450
    %v2452 = vlaneseq
    %v2453 = vshrl.u32 %v2452, 7
    %v2454 = vsub.s32 4, %v2453
    %v2455 = vrot.slane %v2434, %v2454
    %v2456 = vlaneseq
    %v2457 = vshrl.u32 %v2456, 7
    %v2458 = vsub.s32 5, %v2457
    %v2459 = vrot.slane %v2434, %v2458
    %v2460 = vlaneseq
    %v2461 = vshrl.u32 %v2460, 7
    %v2462 = vsub.s32 6, %v2461
    %v2463 = vrot.slane %v2434, %v2462
    %v2464 = vlaneseq
    %v2465 = vshrl.u32 %v2464, 7
    %v2466 = vsub.s32 7, %v2465
    %v2467 = vrot.slane %v2434, %v2466
    %vm2476 = vcmp.le.f32.partialorder %v2272, %v2439
    %vm2477 = vcmp.le.f32.partialorder %v2273, %v2439
    %vm2478 = vcmp.le.f32.partialorder %v2274, %v2443
    %vm2479 = vcmp.le.f32.partialorder %v2275, %v2443
    %vm2480 = vcmp.le.f32.partialorder %v2276, %v2447
    %vm2481 = vcmp.le.f32.partialorder %v2277, %v2447
    %vm2482 = vcmp.le.f32.partialorder %v2278, %v2451
    %vm2483 = vcmp.le.f32.partialorder %v2279, %v2451
    %vm2484 = vcmp.le.f32.partialorder %v2280, %v2455
    %vm2485 = vcmp.le.f32.partialorder %v2281, %v2455
    %vm2486 = vcmp.le.f32.partialorder %v2282, %v2459
    %vm2487 = vcmp.le.f32.partialorder %v2283, %v2459
    %vm2488 = vcmp.le.f32.partialorder %v2284, %v2463
    %vm2489 = vcmp.le.f32.partialorder %v2285, %v2463
    %vm2490 = vcmp.le.f32.partialorder %v2286, %v2467
    %vm2491 = vcmp.le.f32.partialorder %v2287, %v2467
    %v2492 = vsel %vm2476, %v531, 16
    %v2493 = vsel %vm2477, %v535, 16
    %v2494 = vsel %vm2478, %v531, 16
    %v2495 = vsel %vm2479, %v535, 16
    %v2496 = vsel %vm2480, %v531, 16
    %v2497 = vsel %vm2481, %v535, 16
    %v2498 = vsel %vm2482, %v531, 16
    %v2499 = vsel %vm2483, %v535, 16
    %v2500 = vsel %vm2484, %v531, 16
    %v2501 = vsel %vm2485, %v535, 16
    %v2502 = vsel %vm2486, %v531, 16
    %v2503 = vsel %vm2487, %v535, 16
    %v2504 = vsel %vm2488, %v531, 16
    %v2505 = vsel %vm2489, %v535, 16
    %v2506 = vsel %vm2490, %v531, 16
    %v2507 = vsel %vm2491, %v535, 16
    %2508 = vset.pattern.permute.xlu0 0
    %2509 = vperm.xlu0 %2508, %v2492
    %v2510 = vpop.permute.xlu0 %2509
    %2511 = vset.pattern.permute.xlu0 0
    %2512 = vperm.xlu0 %2511, %v2493
    %v2513 = vpop.permute.xlu0 %2512
    %2514 = vset.pattern.permute.xlu0 0
    %2515 = vperm.xlu0 %2514, %v2494
    %v2516 = vpop.permute.xlu0 %2515
    %2517 = vset.pattern.permute.xlu0 0
    %2518 = vperm.xlu0 %2517, %v2495
    %v2519 = vpop.permute.xlu0 %2518
    %2520 = vset.pattern.permute.xlu0 0
    %2521 = vperm.xlu0 %2520, %v2496
    %v2522 = vpop.permute.xlu0 %2521
    %2523 = vset.pattern.permute.xlu0 0
    %2524 = vperm.xlu0 %2523, %v2497
    %v2525 = vpop.permute.xlu0 %2524
    %2526 = vset.pattern.permute.xlu0 0
    %2527 = vperm.xlu0 %2526, %v2498
    %v2528 = vpop.permute.xlu0 %2527
    %2529 = vset.pattern.permute.xlu0 0
    %2530 = vperm.xlu0 %2529, %v2499
    %v2531 = vpop.permute.xlu0 %2530
    %2532 = vset.pattern.permute.xlu0 0
    %2533 = vperm.xlu0 %2532, %v2500
    %v2534 = vpop.permute.xlu0 %2533
    %2535 = vset.pattern.permute.xlu0 0
    %2536 = vperm.xlu0 %2535, %v2501
    %v2537 = vpop.permute.xlu0 %2536
    %2538 = vset.pattern.permute.xlu0 0
    %2539 = vperm.xlu0 %2538, %v2502
    %v2540 = vpop.permute.xlu0 %2539
    %2541 = vset.pattern.permute.xlu0 0
    %2542 = vperm.xlu0 %2541, %v2503
    %v2543 = vpop.permute.xlu0 %2542
    %2544 = vset.pattern.permute.xlu0 0
    %2545 = vperm.xlu0 %2544, %v2504
    %v2546 = vpop.permute.xlu0 %2545
    %2547 = vset.pattern.permute.xlu0 0
    %2548 = vperm.xlu0 %2547, %v2505
    %v2549 = vpop.permute.xlu0 %2548
    %2550 = vset.pattern.permute.xlu0 0
    %2551 = vperm.xlu0 %2550, %v2506
    %v2552 = vpop.permute.xlu0 %2551
    %2553 = vset.pattern.permute.xlu0 0
    %2554 = vperm.xlu0 %2553, %v2507
    %v2555 = vpop.permute.xlu0 %2554
    %v2556 = vlaneseq
    %v2557 = vshrl.u32 %v2556, 7
    %v2558 = vsub.s32 %v92, %v2557
    %v2559 = vrot.slane %v2510, %v2558
    %v2560 = vlaneseq
    %v2561 = vshrl.u32 %v2560, 7
    %v2562 = vsub.s32 %v390, %v2561
    %v2563 = vrot.slane %v2513, %v2562
    %v2564 = vsel %vm395, %v2563, %v2559
    %v2565 = vlaneseq
    %v2566 = vshrl.u32 %v2565, 7
    %v2567 = vsub.s32 %v92, %v2566
    %v2568 = vrot.slane %v2516, %v2567
    %v2569 = vlaneseq
    %v2570 = vshrl.u32 %v2569, 7
    %v2571 = vsub.s32 %v390, %v2570
    %v2572 = vrot.slane %v2519, %v2571
    %v2573 = vsel %vm395, %v2572, %v2568
    %v2574 = vlaneseq
    %v2575 = vshrl.u32 %v2574, 7
    %v2576 = vsub.s32 %v92, %v2575
    %v2577 = vrot.slane %v2522, %v2576
    %v2578 = vlaneseq
    %v2579 = vshrl.u32 %v2578, 7
    %v2580 = vsub.s32 %v390, %v2579
    %v2581 = vrot.slane %v2525, %v2580
    %v2582 = vsel %vm395, %v2581, %v2577
    %v2583 = vlaneseq
    %v2584 = vshrl.u32 %v2583, 7
    %v2585 = vsub.s32 %v92, %v2584
    %v2586 = vrot.slane %v2528, %v2585
    %v2587 = vlaneseq
    %v2588 = vshrl.u32 %v2587, 7
    %v2589 = vsub.s32 %v390, %v2588
    %v2590 = vrot.slane %v2531, %v2589
    %v2591 = vsel %vm395, %v2590, %v2586
    %v2592 = vlaneseq
    %v2593 = vshrl.u32 %v2592, 7
    %v2594 = vsub.s32 %v92, %v2593
    %v2595 = vrot.slane %v2534, %v2594
    %v2596 = vlaneseq
    %v2597 = vshrl.u32 %v2596, 7
    %v2598 = vsub.s32 %v390, %v2597
    %v2599 = vrot.slane %v2537, %v2598
    %v2600 = vsel %vm395, %v2599, %v2595
    %v2601 = vlaneseq
    %v2602 = vshrl.u32 %v2601, 7
    %v2603 = vsub.s32 %v92, %v2602
    %v2604 = vrot.slane %v2540, %v2603
    %v2605 = vlaneseq
    %v2606 = vshrl.u32 %v2605, 7
    %v2607 = vsub.s32 %v390, %v2606
    %v2608 = vrot.slane %v2543, %v2607
    %v2609 = vsel %vm395, %v2608, %v2604
    %v2610 = vlaneseq
    %v2611 = vshrl.u32 %v2610, 7
    %v2612 = vsub.s32 %v92, %v2611
    %v2613 = vrot.slane %v2546, %v2612
    %v2614 = vlaneseq
    %v2615 = vshrl.u32 %v2614, 7
    %v2616 = vsub.s32 %v390, %v2615
    %v2617 = vrot.slane %v2549, %v2616
    %v2618 = vsel %vm395, %v2617, %v2613
    %v2619 = vlaneseq
    %v2620 = vshrl.u32 %v2619, 7
    %v2621 = vsub.s32 %v92, %v2620
    %v2622 = vrot.slane %v2552, %v2621
    %v2623 = vlaneseq
    %v2624 = vshrl.u32 %v2623, 7
    %v2625 = vsub.s32 %v390, %v2624
    %v2626 = vrot.slane %v2555, %v2625
    %v2627 = vsel %vm395, %v2626, %v2622
    %v2628 = vsel %vm102, %v2573, %v2564
    %v2629 = vsel %vm105, %v2582, %v2628
    %v2630 = vsel %vm108, %v2591, %v2629
    %v2631 = vsel %vm111, %v2600, %v2630
    %v2632 = vsel %vm114, %v2609, %v2631
    %v2633 = vsel %vm117, %v2618, %v2632
    %v2634 = vsel %vm120, %v2627, %v2633
    %v2635 = vsel %vm468, %v2634, 2147483647
    %v2636 = vand.u32 %v2635, 65535
    %v2637 = vshra.s32 %v2635, 16
    %v2638 = vcvt.s32.f32 %v2636
    %v2639 = vcvt.s32.f32 %v2637
    %2640 = vmin.xlane.f32.xlu0 %v2639
    %v2641 = vpop.xlane.xlu0 %2640
    %vm2642 = vcmp.eq.f32.partialorder %v2639, %v2641
    %v2643 = vsel %vm2642, %v2638, inf
    %2644 = vmin.xlane.f32.xlu0 %v2643
    %v2645 = vpop.xlane.xlu0 %2644
    %v2646 = vcvt.f32.s32 %v2645
    %v2647 = vcvt.f32.s32 %v2641
    %v2648 = vshll.u32 %v2647, 16
    %v2649 = vadd.s32 %v2648, %v2646
    %vm2650 = vcmp.eq.s32.totalorder %v92, %v2649
    %v2651 = vsel %vm2650, 1, 0
    %v2652 = vcvt.s32.f32 %v2651
    %v2654 = vsel %vm468, %v2652, 0
    %2656 = vmatprep.subr.mxu0 0.0
    %2657 = vmatpush1.msra.mxu0 %v56
    %2658 = vmatprep.subr.mxu0 0.0
    %2659 = vmatpush1.msra.mxu0 %v57
    %2660 = vmatprep.subr.mxu0 0.0
    %2661 = vmatpush1.msra.mxu0 0.0
    %2662 = vmatprep.subr.mxu0 0.0
    %2663 = vmatpush1.msra.mxu0 0.0
    %2664 = vmatprep.subr.mxu0 0.0
    %2665 = vmatpush1.msra.mxu0 0.0
    %2666 = vmatprep.subr.mxu0 0.0
    %2667 = vmatpush1.msra.mxu0 0.0
    %2668 = vmatprep.subr.mxu0 0.0
    %2669 = vmatpush1.msra.mxu0 0.0
    %2670 = vmatprep.subr.mxu0 0.0
    %2671 = vmatpush1.msra.mxu0 0.0
    %2672 = vmatprep.subr.mxu0 0.0
    %2673 = vmatpush1.msra.mxu0 0.0
    %2674 = vmatprep.subr.mxu0 0.0
    %2675 = vmatpush1.msra.mxu0 0.0
    %2676 = vmatprep.subr.mxu0 0.0
    %2677 = vmatpush1.msra.mxu0 0.0
    %2678 = vmatprep.subr.mxu0 0.0
    %2679 = vmatpush1.msra.mxu0 0.0
    %2680 = vmatprep.subr.mxu0 0.0
    %2681 = vmatpush1.msra.mxu0 0.0
    %2682 = vmatprep.subr.mxu0 0.0
    %2683 = vmatpush1.msra.mxu0 0.0
    %2684 = vmatprep.subr.mxu0 0.0
    %2685 = vmatpush1.msra.mxu0 0.0
    %2686 = vmatprep.subr.mxu0 0.0
    %2687 = vmatpush1.msra.mxu0 0.0
    %2688 = vmatprep.subr.mxu0 0.0
    %2689 = vmatpush1.msra.mxu0 0.0
    %2690 = vmatprep.subr.mxu0 0.0
    %2691 = vmatpush1.msra.mxu0 0.0
    %2692 = vmatprep.subr.mxu0 0.0
    %2693 = vmatpush1.msra.mxu0 0.0
    %2694 = vmatprep.subr.mxu0 0.0
    %2695 = vmatpush1.msra.mxu0 0.0
    %2696 = vmatprep.subr.mxu0 0.0
    %2697 = vmatpush1.msra.mxu0 0.0
    %2698 = vmatprep.subr.mxu0 0.0
    %2699 = vmatpush1.msra.mxu0 0.0
    %2700 = vmatprep.subr.mxu0 0.0
    %2701 = vmatpush1.msra.mxu0 0.0
    %2702 = vmatprep.subr.mxu0 0.0
    %2703 = vmatpush1.msra.mxu0 0.0
    %2704 = vmatprep.subr.mxu0 0.0
    %2705 = vmatpush1.msra.mxu0 0.0
    %2706 = vmatprep.subr.mxu0 0.0
    %2707 = vmatpush1.msra.mxu0 0.0
    %2708 = vmatprep.subr.mxu0 0.0
    %2709 = vmatpush1.msra.mxu0 0.0
    %2710 = vmatprep.subr.mxu0 0.0
    %2711 = vmatpush1.msra.mxu0 0.0
    %2712 = vmatprep.subr.mxu0 0.0
    %2713 = vmatpush1.msra.mxu0 0.0
    %2714 = vmatprep.subr.mxu0 0.0
    %2715 = vmatpush1.msra.mxu0 0.0
    %2716 = vmatprep.subr.mxu0 0.0
    %2717 = vmatpush1.msra.mxu0 0.0
    %2718 = vmatprep.subr.mxu0 0.0
    %2719 = vmatpush1.msra.mxu0 0.0
    %2720 = vmatprep.mubr.f32.mxu0 0.0
    %2721 = vmatmul.mubr.f32.gmra.mrb[0].mxu0 %v2654
    %v2722 = vpop.f32.mrb[0].mxu0
    %v2723 = vadd.f32 0.0, %v2722
    %v2724 = vpop.f32.mrb[0].mxu0
    %2725 = vdwg.mxu0
    %2727 = vrot.lane.b32.xlu0 %v1419, 32
    %v2728 = vpop.permute.xlu0 %2727
    %2731 = vrot.lane.b32.xlu0 %v2071, 64
    %v2732 = vpop.permute.xlu0 %2731
    %2735 = vrot.lane.b32.xlu0 %v2723, 96
    %v2736 = vpop.permute.xlu0 %2735
    %v2738 = vsel %vm66, %v767, %v2728
    %vm2739 = vcmask 523264
    %v2740 = vsel %vm2739, %v2738, %v2732
    %vm2741 = vcmask 785408
    %v2742 = vsel %vm2741, %v2740, %v2736
    %2743 = vst [vmem:[#allocation7] sm:$0xff] %v2742
    %vm2744 = vcmask 7168
    %v2745 = vsel %vm2744, %v693, %v1345
    %vm2746 = vcmask 15360
    %v2747 = vsel %vm2746, %v2745, %v1997
    %vm2748 = vcmask 23552
    %v2749 = vsel %vm2748, %v2747, %v2649
    %vm2750 = vcmask 31744
    %2751 = vst.msk [vmem:[%s3] sm:$0xff] %vm2750, %v2749
    // Predicated region
    $region18: #{tpu_custom_call.1} parent=1 // pred_check
      _
    $region19: #{tpu_custom_call.1} parent=1 // pred_check_branch
      %2753 = sbr.rel (0) target = $region21
    $region20: #{tpu_custom_call.1} parent=1 // pred_region
      %s2755 = ssub.s32 128, 128
      %2756 = vsyncadd [#allocation4], %s2755
      %s2758 = sshll.u32 [#allocation7], 4
      %s2759 = int_to_ptr.vmem [resolvable:$true] %s2758
      %2761 = dma.vmem_to_hbm [thread:$0]  %s2759, 128, %s2, [#allocation4]
    $region21: #{tpu_custom_call.1} parent=1 // pred_fallthru
      _
    // Predicated region
    $region22: #{tpu_custom_call.1} parent=1 // pred_check
      _
    $region23: #{tpu_custom_call.1} parent=1 // pred_check_branch
      %2763 = sbr.rel (0) target = $region25
    $region24: #{tpu_custom_call.1} parent=1 // pred_region
      _
    $region25: #{tpu_custom_call.1} parent=1 // pred_fallthru
      _
    // Predicated region
    $region26: #{tpu_custom_call.1} parent=1 // pred_check
      _
    $region27: #{tpu_custom_call.1} parent=1 // pred_check_branch
      %2765 = sbr.rel (0) target = $region29
    $region28: #{tpu_custom_call.1} parent=1 // pred_region
      %2766 = dma.done [#allocation4], 128
    $region29: #{tpu_custom_call.1} parent=1 // pred_fallthru
      _
    // Predicated region
    $region30: #{tpu_custom_call.1} parent=1 // pred_check
      _
    $region31: #{tpu_custom_call.1} parent=1 // pred_check_branch
      %2768 = sbr.rel (0) target = $region33
    $region32: #{tpu_custom_call.1} parent=1 // pred_region
      _
    $region33: #{tpu_custom_call.1} parent=1 // pred_fallthru
      _
    %2769 = vsyncpa [#allocation3], 1
    %2770 = vsyncpa [#allocation6], 1
    %2771 = vsyncpa [#allocation4], 1

</llo_original>
